<compile_context>
chip_gen: v7x
topology: tpu7x:2x2x1
jax: 0.10.0
libtpu: 0.0.40
codegen_flags: <defaults>
</compile_context>

<pallas_src>
import jax
import jax.numpy as jnp
from jax import lax
from jax.experimental import pallas as pl
from jax.experimental.pallas import tpu as pltpu

# ---------------- model config (small, consistent with the module) ----------
BATCH = 2
SEQ = 8
HIDDEN = 32
NUM_HEADS = 4
ATT_SIZE = HIDDEN // NUM_HEADS           # d_k = d_v = 8
SCALE = ATT_SIZE ** (-0.5)
ATTN_DROPOUT_RATE = 0.1
# TODO(synk): attention dropout (self.att_dropout) is identity in eval mode; not applied here.


def mha_kernel(q_ref, k_ref, v_ref, bias_ref,
               wq_ref, bq_ref, wk_ref, bk_ref, wv_ref, bv_ref,
               wo_ref, bo_ref, out_ref):
    """One invocation handles the whole (B, S) problem.

    q_ref/k_ref/v_ref : (B*S, H)
    bias_ref          : (B, NH, S, S)
    wq/wk/wv/wo_ref   : (H, H)   pre-transposed to [in, out] in the wrapper
    bq/bk/bv/bo_ref   : (1, H)
    out_ref           : (B*S, H)
    """
    # ---- projections: three (B*S, H) @ (H, H) MXU matmuls, no transposes ----
    qp = (jnp.dot(q_ref[...], wq_ref[...],
                  preferred_element_type=jnp.float32) + bq_ref[...]) * SCALE
    kp = jnp.dot(k_ref[...], wk_ref[...],
                 preferred_element_type=jnp.float32) + bk_ref[...]
    vp = jnp.dot(v_ref[...], wv_ref[...],
                 preferred_element_type=jnp.float32) + bv_ref[...]

    bias = bias_ref[...]            # (B, NH, S, S)
    wo = wo_ref[...]                # (H, H); rows [h*d:(h+1)*d] are head h's block
    bo = bo_ref[...]                # (1, H)

    # ---- per (batch, head) attention on static slices (no split/merge-head
    #      reshape/transpose relayouts); output projection accumulates per head.
    for b in range(BATCH):
        r0 = b * SEQ
        acc = jnp.zeros((SEQ, HIDDEN), jnp.float32)
        for h in range(NUM_HEADS):
            c0 = h * ATT_SIZE
            q_bh = qp[r0:r0 + SEQ, c0:c0 + ATT_SIZE]        # (S, d)
            k_bh = kp[r0:r0 + SEQ, c0:c0 + ATT_SIZE]        # (S, d)
            v_bh = vp[r0:r0 + SEQ, c0:c0 + ATT_SIZE]        # (S, d)

            # scores = q @ k^T via dot_general (contract last dims; no .T tile op)
            s_bh = lax.dot_general(q_bh, k_bh, (((1,), (1,)), ((), ())),
                                   preferred_element_type=jnp.float32)   # (S, S)
            s_bh = s_bh + bias[b, h]

            # softmax over the key axis (exact normalization)
            m = jnp.max(s_bh, axis=-1, keepdims=True)
            e = jnp.exp(s_bh - m)
            p = e / jnp.sum(e, axis=-1, keepdims=True)

            ctx_bh = jnp.dot(p, v_bh,
                             preferred_element_type=jnp.float32)         # (S, d)

            # merge-heads-free output projection: ctx_h @ Wo_h, MXU-accumulated
            acc = acc + jnp.dot(ctx_bh, wo[c0:c0 + ATT_SIZE, :],
                                preferred_element_type=jnp.float32)      # (S, H)

        out_ref[r0:r0 + SEQ, :] = (acc + bo).astype(out_ref.dtype)


def multi_head_attention(q, k, v, attn_bias, params):
    B, S, H = q.shape
    wq, bq, wk, bk, wv, bv, wo, bo = params

    # Wrapper-side layout plumbing (XLA, amortized): pre-transpose all weights
    # to [in, out]; flatten (B, S) -> B*S (free leading-dim reshape).
    wq_t, wk_t, wv_t, wo_t = wq.T, wk.T, wv.T, wo.T
    q2 = q.reshape(B * S, H)
    k2 = k.reshape(B * S, H)
    v2 = v.reshape(B * S, H)

    full = lambda shape: pl.BlockSpec(shape, lambda i: (0,) * len(shape))

    out_flat = pl.pallas_call(
        mha_kernel,
        out_shape=jax.ShapeDtypeStruct((B * S, H), q.dtype),
        grid=(1,),
        in_specs=[
            full((B * S, H)),                # q
            full((B * S, H)),                # k
            full((B * S, H)),                # v
            full((B, NUM_HEADS, S, S)),      # attn_bias
            full((H, H)), full((1, H)),      # Wq.T, bq
            full((H, H)), full((1, H)),      # Wk.T, bk
            full((H, H)), full((1, H)),      # Wv.T, bv
            full((H, H)), full((1, H)),      # Wo.T, bo
        ],
        out_specs=full((B * S, H)),
        compiler_params=pltpu.CompilerParams(
            dimension_semantics=("arbitrary",)),
    )(q2, k2, v2, attn_bias, wq_t, bq, wk_t, bk, wv_t, bv, wo_t, bo)

    return out_flat.reshape(B, S, H)


def reference(q, k, v, attn_bias, params):
    """Pure-JAX reference mirroring the PyTorch forward (dropout = identity)."""
    wq, bq, wk, bk, wv, bv, wo, bo = params
    B, S, H = q.shape
    qp = (q @ wq.T + bq).reshape(B, S, NUM_HEADS, ATT_SIZE).transpose(0, 2, 1, 3)
    kp = (k @ wk.T + bk).reshape(B, S, NUM_HEADS, ATT_SIZE).transpose(0, 2, 1, 3)
    vp = (v @ wv.T + bv).reshape(B, S, NUM_HEADS, ATT_SIZE).transpose(0, 2, 1, 3)
    scores = jnp.einsum('bhqd,bhkd->bhqk', qp * SCALE, kp) + attn_bias
    probs = jax.nn.softmax(scores, axis=-1)
    ctx = jnp.einsum('bhqk,bhkd->bhqd', probs, vp)
    ctx = ctx.transpose(0, 2, 1, 3).reshape(B, S, NUM_HEADS * ATT_SIZE)
    return ctx @ wo.T + bo


def init_params(key):
    ks = jax.random.split(key, 8)
    bound = 1.0 / (HIDDEN ** 0.5)

    def lin(kw, kb):
        w = jax.random.uniform(kw, (HIDDEN, HIDDEN), jnp.float32, -bound, bound)
        b = jax.random.uniform(kb, (1, HIDDEN), jnp.float32, -bound, bound)
        return w, b

    wq, bq = lin(ks[0], ks[1])
    wk, bk = lin(ks[2], ks[3])
    wv, bv = lin(ks[4], ks[5])
    wo, bo = lin(ks[6], ks[7])
    return (wq, bq, wk, bk, wv, bv, wo, bo)


if __name__ == "__main__":
    key = jax.random.PRNGKey(0)
    k_p, k_q, k_k, k_v, k_b = jax.random.split(key, 5)

    params = init_params(k_p)
    q = jax.random.normal(k_q, (BATCH, SEQ, HIDDEN), jnp.float32)
    k = jax.random.normal(k_k, (BATCH, SEQ, HIDDEN), jnp.float32)
    v = jax.random.normal(k_v, (BATCH, SEQ, HIDDEN), jnp.float32)
    attn_bias = jax.random.normal(k_b, (BATCH, NUM_HEADS, SEQ, SEQ), jnp.float32)

    out = multi_head_attention(q, k, v, attn_bias, params)
    out = jax.block_until_ready(out)

    ref = reference(q, k, v, attn_bias, params)
    assert out.shape == (BATCH, SEQ, HIDDEN)
    assert jnp.allclose(out, ref, atol=1e-3, rtol=1e-3), \
        f"max abs err {jnp.max(jnp.abs(out - ref))}"

    print("KERNEL_OK")
</pallas_src>

<mosaic_0001>
module attributes {stable_mosaic.version = 11 : i64} {
  func.func @mha_kernel(%arg0: i32, %arg1: memref<16x32xf32, #tpu.memory_space<vmem>>, %arg2: memref<16x32xf32, #tpu.memory_space<vmem>>, %arg3: memref<16x32xf32, #tpu.memory_space<vmem>>, %arg4: memref<2x4x8x8xf32, #tpu.memory_space<vmem>>, %arg5: memref<32x32xf32, #tpu.memory_space<vmem>>, %arg6: memref<1x32xf32, #tpu.memory_space<vmem>>, %arg7: memref<32x32xf32, #tpu.memory_space<vmem>>, %arg8: memref<1x32xf32, #tpu.memory_space<vmem>>, %arg9: memref<32x32xf32, #tpu.memory_space<vmem>>, %arg10: memref<1x32xf32, #tpu.memory_space<vmem>>, %arg11: memref<32x32xf32, #tpu.memory_space<vmem>>, %arg12: memref<1x32xf32, #tpu.memory_space<vmem>>, %arg13: memref<16x32xf32, #tpu.memory_space<vmem>>) attributes {dimension_semantics = [#tpu.dimension_semantics<arbitrary>], iteration_bounds = array<i64: 1>, scalar_prefetch = 0 : i64, scratch_operands = 0 : i64, tpu.core_type = #tpu.core_type<tc>, window_params = [{pipeline_mode = #tpu.pipeline_mode<synchronous>, transform_indices = @transform_0, window_bounds = array<i64: 16, 32>}, {pipeline_mode = #tpu.pipeline_mode<synchronous>, transform_indices = @transform_1, window_bounds = array<i64: 16, 32>}, {pipeline_mode = #tpu.pipeline_mode<synchronous>, transform_indices = @transform_2, window_bounds = array<i64: 16, 32>}, {pipeline_mode = #tpu.pipeline_mode<synchronous>, transform_indices = @transform_3, window_bounds = array<i64: 2, 4, 8, 8>}, {pipeline_mode = #tpu.pipeline_mode<synchronous>, transform_indices = @transform_4, window_bounds = array<i64: 32, 32>}, {pipeline_mode = #tpu.pipeline_mode<synchronous>, transform_indices = @transform_5, window_bounds = array<i64: 1, 32>}, {pipeline_mode = #tpu.pipeline_mode<synchronous>, transform_indices = @transform_6, window_bounds = array<i64: 32, 32>}, {pipeline_mode = #tpu.pipeline_mode<synchronous>, transform_indices = @transform_7, window_bounds = array<i64: 1, 32>}, {pipeline_mode = #tpu.pipeline_mode<synchronous>, transform_indices = @transform_8, window_bounds = array<i64: 32, 32>}, {pipeline_mode = #tpu.pipeline_mode<synchronous>, transform_indices = @transform_9, window_bounds = array<i64: 1, 32>}, {pipeline_mode = #tpu.pipeline_mode<synchronous>, transform_indices = @transform_10, window_bounds = array<i64: 32, 32>}, {pipeline_mode = #tpu.pipeline_mode<synchronous>, transform_indices = @transform_11, window_bounds = array<i64: 1, 32>}, {pipeline_mode = #tpu.pipeline_mode<synchronous>, transform_indices = @transform_12, window_bounds = array<i64: 16, 32>}]} {
    %c0 = arith.constant 0 : index
    %c0_0 = arith.constant 0 : index
    %0 = vector.load %arg1[%c0, %c0_0] : memref<16x32xf32, #tpu.memory_space<vmem>>, vector<16x32xf32>
    %c0_1 = arith.constant 0 : index
    %c0_2 = arith.constant 0 : index
    %1 = vector.load %arg5[%c0_1, %c0_2] : memref<32x32xf32, #tpu.memory_space<vmem>>, vector<32x32xf32>
    %cst = arith.constant dense<0.000000e+00> : vector<16x32xf32>
    %2 = tpu.matmul %0, %1, %cst {dimension_numbers = #tpu.dot_dimension_numbers<[1], [0], [0], [1], [0, 0, 1, 1], [], []>} : vector<16x32xf32>, vector<32x32xf32>, vector<16x32xf32> -> vector<16x32xf32>
    %c0_3 = arith.constant 0 : index
    %c0_4 = arith.constant 0 : index
    %3 = vector.load %arg6[%c0_3, %c0_4] : memref<1x32xf32, #tpu.memory_space<vmem>>, vector<1x32xf32>
    %4 = vector.broadcast %3 : vector<1x32xf32> to vector<16x32xf32>
    %5 = arith.addf %2, %4 : vector<16x32xf32>
    %cst_5 = arith.constant 0.353553385 : f32
    %6 = vector.broadcast %cst_5 : f32 to vector<16x32xf32>
    %7 = arith.mulf %5, %6 : vector<16x32xf32>
    %c0_6 = arith.constant 0 : index
    %c0_7 = arith.constant 0 : index
    %8 = vector.load %arg2[%c0_6, %c0_7] : memref<16x32xf32, #tpu.memory_space<vmem>>, vector<16x32xf32>
    %c0_8 = arith.constant 0 : index
    %c0_9 = arith.constant 0 : index
    %9 = vector.load %arg7[%c0_8, %c0_9] : memref<32x32xf32, #tpu.memory_space<vmem>>, vector<32x32xf32>
    %cst_10 = arith.constant dense<0.000000e+00> : vector<16x32xf32>
    %10 = tpu.matmul %8, %9, %cst_10 {dimension_numbers = #tpu.dot_dimension_numbers<[1], [0], [0], [1], [0, 0, 1, 1], [], []>} : vector<16x32xf32>, vector<32x32xf32>, vector<16x32xf32> -> vector<16x32xf32>
    %c0_11 = arith.constant 0 : index
    %c0_12 = arith.constant 0 : index
    %11 = vector.load %arg8[%c0_11, %c0_12] : memref<1x32xf32, #tpu.memory_space<vmem>>, vector<1x32xf32>
    %12 = vector.broadcast %11 : vector<1x32xf32> to vector<16x32xf32>
    %13 = arith.addf %10, %12 : vector<16x32xf32>
    %c0_13 = arith.constant 0 : index
    %c0_14 = arith.constant 0 : index
    %14 = vector.load %arg3[%c0_13, %c0_14] : memref<16x32xf32, #tpu.memory_space<vmem>>, vector<16x32xf32>
    %c0_15 = arith.constant 0 : index
    %c0_16 = arith.constant 0 : index
    %15 = vector.load %arg9[%c0_15, %c0_16] : memref<32x32xf32, #tpu.memory_space<vmem>>, vector<32x32xf32>
    %cst_17 = arith.constant dense<0.000000e+00> : vector<16x32xf32>
    %16 = tpu.matmul %14, %15, %cst_17 {dimension_numbers = #tpu.dot_dimension_numbers<[1], [0], [0], [1], [0, 0, 1, 1], [], []>} : vector<16x32xf32>, vector<32x32xf32>, vector<16x32xf32> -> vector<16x32xf32>
    %c0_18 = arith.constant 0 : index
    %c0_19 = arith.constant 0 : index
    %17 = vector.load %arg10[%c0_18, %c0_19] : memref<1x32xf32, #tpu.memory_space<vmem>>, vector<1x32xf32>
    %18 = vector.broadcast %17 : vector<1x32xf32> to vector<16x32xf32>
    %19 = arith.addf %16, %18 : vector<16x32xf32>
    %c0_20 = arith.constant 0 : index
    %c0_21 = arith.constant 0 : index
    %c0_22 = arith.constant 0 : index
    %c0_23 = arith.constant 0 : index
    %20 = vector.load %arg4[%c0_20, %c0_21, %c0_22, %c0_23] : memref<2x4x8x8xf32, #tpu.memory_space<vmem>>, vector<2x4x8x8xf32>
    %c0_24 = arith.constant 0 : index
    %c0_25 = arith.constant 0 : index
    %21 = vector.load %arg11[%c0_24, %c0_25] : memref<32x32xf32, #tpu.memory_space<vmem>>, vector<32x32xf32>
    %c0_26 = arith.constant 0 : index
    %c0_27 = arith.constant 0 : index
    %22 = vector.load %arg12[%c0_26, %c0_27] : memref<1x32xf32, #tpu.memory_space<vmem>>, vector<1x32xf32>
    %cst_28 = arith.constant 0.000000e+00 : f32
    %23 = vector.broadcast %cst_28 : f32 to vector<8x32xf32>
    %24 = vector.extract_strided_slice %7 {offsets = [0, 0], sizes = [8, 8], strides = [1, 1]} : vector<16x32xf32> to vector<8x8xf32>
    %25 = vector.extract_strided_slice %13 {offsets = [0, 0], sizes = [8, 8], strides = [1, 1]} : vector<16x32xf32> to vector<8x8xf32>
    %26 = vector.extract_strided_slice %19 {offsets = [0, 0], sizes = [8, 8], strides = [1, 1]} : vector<16x32xf32> to vector<8x8xf32>
    %cst_29 = arith.constant dense<0.000000e+00> : vector<8x8xf32>
    %27 = tpu.matmul %24, %25, %cst_29 {dimension_numbers = #tpu.dot_dimension_numbers<[1], [1], [0], [0], [0, 0, 1, 0], [], []>} : vector<8x8xf32>, vector<8x8xf32>, vector<8x8xf32> -> vector<8x8xf32>
    %28 = vector.extract_strided_slice %20 {offsets = [0, 0, 0, 0], sizes = [1, 1, 8, 8], strides = [1, 1, 1, 1]} : vector<2x4x8x8xf32> to vector<1x1x8x8xf32>
    %29 = vector.shape_cast %28 : vector<1x1x8x8xf32> to vector<8x8xf32>
    %30 = arith.addf %27, %29 : vector<8x8xf32>
    %cst_30 = arith.constant dense<0xFF800000> : vector<8xf32>
    %31 = vector.multi_reduction <maximumf>, %30, %cst_30 [1] : vector<8x8xf32> to vector<8xf32>
    %32 = vector.shape_cast %31 : vector<8xf32> to vector<8x1xf32>
    %33 = vector.broadcast %32 : vector<8x1xf32> to vector<8x8xf32>
    %34 = arith.subf %30, %33 : vector<8x8xf32>
    %35 = math.exp %34 : vector<8x8xf32>
    %cst_31 = arith.constant dense<0.000000e+00> : vector<8xf32>
    %36 = vector.multi_reduction <add>, %35, %cst_31 [1] : vector<8x8xf32> to vector<8xf32>
    %37 = vector.shape_cast %36 : vector<8xf32> to vector<8x1xf32>
    %38 = vector.broadcast %37 : vector<8x1xf32> to vector<8x8xf32>
    %39 = arith.divf %35, %38 : vector<8x8xf32>
    %cst_32 = arith.constant dense<0.000000e+00> : vector<8x8xf32>
    %40 = tpu.matmul %39, %26, %cst_32 {dimension_numbers = #tpu.dot_dimension_numbers<[1], [0], [0], [1], [0, 0, 1, 1], [], []>} : vector<8x8xf32>, vector<8x8xf32>, vector<8x8xf32> -> vector<8x8xf32>
    %41 = vector.extract_strided_slice %21 {offsets = [0, 0], sizes = [8, 32], strides = [1, 1]} : vector<32x32xf32> to vector<8x32xf32>
    %cst_33 = arith.constant dense<0.000000e+00> : vector<8x32xf32>
    %42 = tpu.matmul %40, %41, %cst_33 {dimension_numbers = #tpu.dot_dimension_numbers<[1], [0], [0], [1], [0, 0, 1, 1], [], []>} : vector<8x8xf32>, vector<8x32xf32>, vector<8x32xf32> -> vector<8x32xf32>
    %43 = arith.addf %23, %42 : vector<8x32xf32>
    %44 = vector.extract_strided_slice %7 {offsets = [0, 8], sizes = [8, 8], strides = [1, 1]} : vector<16x32xf32> to vector<8x8xf32>
    %45 = vector.extract_strided_slice %13 {offsets = [0, 8], sizes = [8, 8], strides = [1, 1]} : vector<16x32xf32> to vector<8x8xf32>
    %46 = vector.extract_strided_slice %19 {offsets = [0, 8], sizes = [8, 8], strides = [1, 1]} : vector<16x32xf32> to vector<8x8xf32>
    %cst_34 = arith.constant dense<0.000000e+00> : vector<8x8xf32>
    %47 = tpu.matmul %44, %45, %cst_34 {dimension_numbers = #tpu.dot_dimension_numbers<[1], [1], [0], [0], [0, 0, 1, 0], [], []>} : vector<8x8xf32>, vector<8x8xf32>, vector<8x8xf32> -> vector<8x8xf32>
    %48 = vector.extract_strided_slice %20 {offsets = [0, 1, 0, 0], sizes = [1, 1, 8, 8], strides = [1, 1, 1, 1]} : vector<2x4x8x8xf32> to vector<1x1x8x8xf32>
    %49 = vector.shape_cast %48 : vector<1x1x8x8xf32> to vector<8x8xf32>
    %50 = arith.addf %47, %49 : vector<8x8xf32>
    %cst_35 = arith.constant dense<0xFF800000> : vector<8xf32>
    %51 = vector.multi_reduction <maximumf>, %50, %cst_35 [1] : vector<8x8xf32> to vector<8xf32>
    %52 = vector.shape_cast %51 : vector<8xf32> to vector<8x1xf32>
    %53 = vector.broadcast %52 : vector<8x1xf32> to vector<8x8xf32>
    %54 = arith.subf %50, %53 : vector<8x8xf32>
    %55 = math.exp %54 : vector<8x8xf32>
    %cst_36 = arith.constant dense<0.000000e+00> : vector<8xf32>
    %56 = vector.multi_reduction <add>, %55, %cst_36 [1] : vector<8x8xf32> to vector<8xf32>
    %57 = vector.shape_cast %56 : vector<8xf32> to vector<8x1xf32>
    %58 = vector.broadcast %57 : vector<8x1xf32> to vector<8x8xf32>
    %59 = arith.divf %55, %58 : vector<8x8xf32>
    %cst_37 = arith.constant dense<0.000000e+00> : vector<8x8xf32>
    %60 = tpu.matmul %59, %46, %cst_37 {dimension_numbers = #tpu.dot_dimension_numbers<[1], [0], [0], [1], [0, 0, 1, 1], [], []>} : vector<8x8xf32>, vector<8x8xf32>, vector<8x8xf32> -> vector<8x8xf32>
    %61 = vector.extract_strided_slice %21 {offsets = [8, 0], sizes = [8, 32], strides = [1, 1]} : vector<32x32xf32> to vector<8x32xf32>
    %cst_38 = arith.constant dense<0.000000e+00> : vector<8x32xf32>
    %62 = tpu.matmul %60, %61, %cst_38 {dimension_numbers = #tpu.dot_dimension_numbers<[1], [0], [0], [1], [0, 0, 1, 1], [], []>} : vector<8x8xf32>, vector<8x32xf32>, vector<8x32xf32> -> vector<8x32xf32>
    %63 = arith.addf %43, %62 : vector<8x32xf32>
    %64 = vector.extract_strided_slice %7 {offsets = [0, 16], sizes = [8, 8], strides = [1, 1]} : vector<16x32xf32> to vector<8x8xf32>
    %65 = vector.extract_strided_slice %13 {offsets = [0, 16], sizes = [8, 8], strides = [1, 1]} : vector<16x32xf32> to vector<8x8xf32>
    %66 = vector.extract_strided_slice %19 {offsets = [0, 16], sizes = [8, 8], strides = [1, 1]} : vector<16x32xf32> to vector<8x8xf32>
    %cst_39 = arith.constant dense<0.000000e+00> : vector<8x8xf32>
    %67 = tpu.matmul %64, %65, %cst_39 {dimension_numbers = #tpu.dot_dimension_numbers<[1], [1], [0], [0], [0, 0, 1, 0], [], []>} : vector<8x8xf32>, vector<8x8xf32>, vector<8x8xf32> -> vector<8x8xf32>
    %68 = vector.extract_strided_slice %20 {offsets = [0, 2, 0, 0], sizes = [1, 1, 8, 8], strides = [1, 1, 1, 1]} : vector<2x4x8x8xf32> to vector<1x1x8x8xf32>
    %69 = vector.shape_cast %68 : vector<1x1x8x8xf32> to vector<8x8xf32>
    %70 = arith.addf %67, %69 : vector<8x8xf32>
    %cst_40 = arith.constant dense<0xFF800000> : vector<8xf32>
    %71 = vector.multi_reduction <maximumf>, %70, %cst_40 [1] : vector<8x8xf32> to vector<8xf32>
    %72 = vector.shape_cast %71 : vector<8xf32> to vector<8x1xf32>
    %73 = vector.broadcast %72 : vector<8x1xf32> to vector<8x8xf32>
    %74 = arith.subf %70, %73 : vector<8x8xf32>
    %75 = math.exp %74 : vector<8x8xf32>
    %cst_41 = arith.constant dense<0.000000e+00> : vector<8xf32>
    %76 = vector.multi_reduction <add>, %75, %cst_41 [1] : vector<8x8xf32> to vector<8xf32>
    %77 = vector.shape_cast %76 : vector<8xf32> to vector<8x1xf32>
    %78 = vector.broadcast %77 : vector<8x1xf32> to vector<8x8xf32>
    %79 = arith.divf %75, %78 : vector<8x8xf32>
    %cst_42 = arith.constant dense<0.000000e+00> : vector<8x8xf32>
    %80 = tpu.matmul %79, %66, %cst_42 {dimension_numbers = #tpu.dot_dimension_numbers<[1], [0], [0], [1], [0, 0, 1, 1], [], []>} : vector<8x8xf32>, vector<8x8xf32>, vector<8x8xf32> -> vector<8x8xf32>
    %81 = vector.extract_strided_slice %21 {offsets = [16, 0], sizes = [8, 32], strides = [1, 1]} : vector<32x32xf32> to vector<8x32xf32>
    %cst_43 = arith.constant dense<0.000000e+00> : vector<8x32xf32>
    %82 = tpu.matmul %80, %81, %cst_43 {dimension_numbers = #tpu.dot_dimension_numbers<[1], [0], [0], [1], [0, 0, 1, 1], [], []>} : vector<8x8xf32>, vector<8x32xf32>, vector<8x32xf32> -> vector<8x32xf32>
    %83 = arith.addf %63, %82 : vector<8x32xf32>
    %84 = vector.extract_strided_slice %7 {offsets = [0, 24], sizes = [8, 8], strides = [1, 1]} : vector<16x32xf32> to vector<8x8xf32>
    %85 = vector.extract_strided_slice %13 {offsets = [0, 24], sizes = [8, 8], strides = [1, 1]} : vector<16x32xf32> to vector<8x8xf32>
    %86 = vector.extract_strided_slice %19 {offsets = [0, 24], sizes = [8, 8], strides = [1, 1]} : vector<16x32xf32> to vector<8x8xf32>
    %cst_44 = arith.constant dense<0.000000e+00> : vector<8x8xf32>
    %87 = tpu.matmul %84, %85, %cst_44 {dimension_numbers = #tpu.dot_dimension_numbers<[1], [1], [0], [0], [0, 0, 1, 0], [], []>} : vector<8x8xf32>, vector<8x8xf32>, vector<8x8xf32> -> vector<8x8xf32>
    %88 = vector.extract_strided_slice %20 {offsets = [0, 3, 0, 0], sizes = [1, 1, 8, 8], strides = [1, 1, 1, 1]} : vector<2x4x8x8xf32> to vector<1x1x8x8xf32>
    %89 = vector.shape_cast %88 : vector<1x1x8x8xf32> to vector<8x8xf32>
    %90 = arith.addf %87, %89 : vector<8x8xf32>
    %cst_45 = arith.constant dense<0xFF800000> : vector<8xf32>
    %91 = vector.multi_reduction <maximumf>, %90, %cst_45 [1] : vector<8x8xf32> to vector<8xf32>
    %92 = vector.shape_cast %91 : vector<8xf32> to vector<8x1xf32>
    %93 = vector.broadcast %92 : vector<8x1xf32> to vector<8x8xf32>
    %94 = arith.subf %90, %93 : vector<8x8xf32>
    %95 = math.exp %94 : vector<8x8xf32>
    %cst_46 = arith.constant dense<0.000000e+00> : vector<8xf32>
    %96 = vector.multi_reduction <add>, %95, %cst_46 [1] : vector<8x8xf32> to vector<8xf32>
    %97 = vector.shape_cast %96 : vector<8xf32> to vector<8x1xf32>
    %98 = vector.broadcast %97 : vector<8x1xf32> to vector<8x8xf32>
    %99 = arith.divf %95, %98 : vector<8x8xf32>
    %cst_47 = arith.constant dense<0.000000e+00> : vector<8x8xf32>
    %100 = tpu.matmul %99, %86, %cst_47 {dimension_numbers = #tpu.dot_dimension_numbers<[1], [0], [0], [1], [0, 0, 1, 1], [], []>} : vector<8x8xf32>, vector<8x8xf32>, vector<8x8xf32> -> vector<8x8xf32>
    %101 = vector.extract_strided_slice %21 {offsets = [24, 0], sizes = [8, 32], strides = [1, 1]} : vector<32x32xf32> to vector<8x32xf32>
    %cst_48 = arith.constant dense<0.000000e+00> : vector<8x32xf32>
    %102 = tpu.matmul %100, %101, %cst_48 {dimension_numbers = #tpu.dot_dimension_numbers<[1], [0], [0], [1], [0, 0, 1, 1], [], []>} : vector<8x8xf32>, vector<8x32xf32>, vector<8x32xf32> -> vector<8x32xf32>
    %103 = arith.addf %83, %102 : vector<8x32xf32>
    %104 = vector.broadcast %22 : vector<1x32xf32> to vector<8x32xf32>
    %105 = arith.addf %103, %104 : vector<8x32xf32>
    %c0_49 = arith.constant 0 : index
    %c0_50 = arith.constant 0 : index
    %106 = vector.load %arg13[%c0_49, %c0_50] : memref<16x32xf32, #tpu.memory_space<vmem>>, vector<8x32xf32>
    tpu.vector_store %arg13[%c0_49, %c0_50], %105 {strides = array<i32>} : memref<16x32xf32, #tpu.memory_space<vmem>>, vector<8x32xf32>,
    %cst_51 = arith.constant 0.000000e+00 : f32
    %107 = vector.broadcast %cst_51 : f32 to vector<8x32xf32>
    %108 = vector.extract_strided_slice %7 {offsets = [8, 0], sizes = [8, 8], strides = [1, 1]} : vector<16x32xf32> to vector<8x8xf32>
    %109 = vector.extract_strided_slice %13 {offsets = [8, 0], sizes = [8, 8], strides = [1, 1]} : vector<16x32xf32> to vector<8x8xf32>
    %110 = vector.extract_strided_slice %19 {offsets = [8, 0], sizes = [8, 8], strides = [1, 1]} : vector<16x32xf32> to vector<8x8xf32>
    %cst_52 = arith.constant dense<0.000000e+00> : vector<8x8xf32>
    %111 = tpu.matmul %108, %109, %cst_52 {dimension_numbers = #tpu.dot_dimension_numbers<[1], [1], [0], [0], [0, 0, 1, 0], [], []>} : vector<8x8xf32>, vector<8x8xf32>, vector<8x8xf32> -> vector<8x8xf32>
    %112 = vector.extract_strided_slice %20 {offsets = [1, 0, 0, 0], sizes = [1, 1, 8, 8], strides = [1, 1, 1, 1]} : vector<2x4x8x8xf32> to vector<1x1x8x8xf32>
    %113 = vector.shape_cast %112 : vector<1x1x8x8xf32> to vector<8x8xf32>
    %114 = arith.addf %111, %113 : vector<8x8xf32>
    %cst_53 = arith.constant dense<0xFF800000> : vector<8xf32>
    %115 = vector.multi_reduction <maximumf>, %114, %cst_53 [1] : vector<8x8xf32> to vector<8xf32>
    %116 = vector.shape_cast %115 : vector<8xf32> to vector<8x1xf32>
    %117 = vector.broadcast %116 : vector<8x1xf32> to vector<8x8xf32>
    %118 = arith.subf %114, %117 : vector<8x8xf32>
    %119 = math.exp %118 : vector<8x8xf32>
    %cst_54 = arith.constant dense<0.000000e+00> : vector<8xf32>
    %120 = vector.multi_reduction <add>, %119, %cst_54 [1] : vector<8x8xf32> to vector<8xf32>
    %121 = vector.shape_cast %120 : vector<8xf32> to vector<8x1xf32>
    %122 = vector.broadcast %121 : vector<8x1xf32> to vector<8x8xf32>
    %123 = arith.divf %119, %122 : vector<8x8xf32>
    %cst_55 = arith.constant dense<0.000000e+00> : vector<8x8xf32>
    %124 = tpu.matmul %123, %110, %cst_55 {dimension_numbers = #tpu.dot_dimension_numbers<[1], [0], [0], [1], [0, 0, 1, 1], [], []>} : vector<8x8xf32>, vector<8x8xf32>, vector<8x8xf32> -> vector<8x8xf32>
    %125 = vector.extract_strided_slice %21 {offsets = [0, 0], sizes = [8, 32], strides = [1, 1]} : vector<32x32xf32> to vector<8x32xf32>
    %cst_56 = arith.constant dense<0.000000e+00> : vector<8x32xf32>
    %126 = tpu.matmul %124, %125, %cst_56 {dimension_numbers = #tpu.dot_dimension_numbers<[1], [0], [0], [1], [0, 0, 1, 1], [], []>} : vector<8x8xf32>, vector<8x32xf32>, vector<8x32xf32> -> vector<8x32xf32>
    %127 = arith.addf %107, %126 : vector<8x32xf32>
    %128 = vector.extract_strided_slice %7 {offsets = [8, 8], sizes = [8, 8], strides = [1, 1]} : vector<16x32xf32> to vector<8x8xf32>
    %129 = vector.extract_strided_slice %13 {offsets = [8, 8], sizes = [8, 8], strides = [1, 1]} : vector<16x32xf32> to vector<8x8xf32>
    %130 = vector.extract_strided_slice %19 {offsets = [8, 8], sizes = [8, 8], strides = [1, 1]} : vector<16x32xf32> to vector<8x8xf32>
    %cst_57 = arith.constant dense<0.000000e+00> : vector<8x8xf32>
    %131 = tpu.matmul %128, %129, %cst_57 {dimension_numbers = #tpu.dot_dimension_numbers<[1], [1], [0], [0], [0, 0, 1, 0], [], []>} : vector<8x8xf32>, vector<8x8xf32>, vector<8x8xf32> -> vector<8x8xf32>
    %132 = vector.extract_strided_slice %20 {offsets = [1, 1, 0, 0], sizes = [1, 1, 8, 8], strides = [1, 1, 1, 1]} : vector<2x4x8x8xf32> to vector<1x1x8x8xf32>
    %133 = vector.shape_cast %132 : vector<1x1x8x8xf32> to vector<8x8xf32>
    %134 = arith.addf %131, %133 : vector<8x8xf32>
    %cst_58 = arith.constant dense<0xFF800000> : vector<8xf32>
    %135 = vector.multi_reduction <maximumf>, %134, %cst_58 [1] : vector<8x8xf32> to vector<8xf32>
    %136 = vector.shape_cast %135 : vector<8xf32> to vector<8x1xf32>
    %137 = vector.broadcast %136 : vector<8x1xf32> to vector<8x8xf32>
    %138 = arith.subf %134, %137 : vector<8x8xf32>
    %139 = math.exp %138 : vector<8x8xf32>
    %cst_59 = arith.constant dense<0.000000e+00> : vector<8xf32>
    %140 = vector.multi_reduction <add>, %139, %cst_59 [1] : vector<8x8xf32> to vector<8xf32>
    %141 = vector.shape_cast %140 : vector<8xf32> to vector<8x1xf32>
    %142 = vector.broadcast %141 : vector<8x1xf32> to vector<8x8xf32>
    %143 = arith.divf %139, %142 : vector<8x8xf32>
    %cst_60 = arith.constant dense<0.000000e+00> : vector<8x8xf32>
    %144 = tpu.matmul %143, %130, %cst_60 {dimension_numbers = #tpu.dot_dimension_numbers<[1], [0], [0], [1], [0, 0, 1, 1], [], []>} : vector<8x8xf32>, vector<8x8xf32>, vector<8x8xf32> -> vector<8x8xf32>
    %145 = vector.extract_strided_slice %21 {offsets = [8, 0], sizes = [8, 32], strides = [1, 1]} : vector<32x32xf32> to vector<8x32xf32>
    %cst_61 = arith.constant dense<0.000000e+00> : vector<8x32xf32>
    %146 = tpu.matmul %144, %145, %cst_61 {dimension_numbers = #tpu.dot_dimension_numbers<[1], [0], [0], [1], [0, 0, 1, 1], [], []>} : vector<8x8xf32>, vector<8x32xf32>, vector<8x32xf32> -> vector<8x32xf32>
    %147 = arith.addf %127, %146 : vector<8x32xf32>
    %148 = vector.extract_strided_slice %7 {offsets = [8, 16], sizes = [8, 8], strides = [1, 1]} : vector<16x32xf32> to vector<8x8xf32>
    %149 = vector.extract_strided_slice %13 {offsets = [8, 16], sizes = [8, 8], strides = [1, 1]} : vector<16x32xf32> to vector<8x8xf32>
    %150 = vector.extract_strided_slice %19 {offsets = [8, 16], sizes = [8, 8], strides = [1, 1]} : vector<16x32xf32> to vector<8x8xf32>
    %cst_62 = arith.constant dense<0.000000e+00> : vector<8x8xf32>
    %151 = tpu.matmul %148, %149, %cst_62 {dimension_numbers = #tpu.dot_dimension_numbers<[1], [1], [0], [0], [0, 0, 1, 0], [], []>} : vector<8x8xf32>, vector<8x8xf32>, vector<8x8xf32> -> vector<8x8xf32>
    %152 = vector.extract_strided_slice %20 {offsets = [1, 2, 0, 0], sizes = [1, 1, 8, 8], strides = [1, 1, 1, 1]} : vector<2x4x8x8xf32> to vector<1x1x8x8xf32>
    %153 = vector.shape_cast %152 : vector<1x1x8x8xf32> to vector<8x8xf32>
    %154 = arith.addf %151, %153 : vector<8x8xf32>
    %cst_63 = arith.constant dense<0xFF800000> : vector<8xf32>
    %155 = vector.multi_reduction <maximumf>, %154, %cst_63 [1] : vector<8x8xf32> to vector<8xf32>
    %156 = vector.shape_cast %155 : vector<8xf32> to vector<8x1xf32>
    %157 = vector.broadcast %156 : vector<8x1xf32> to vector<8x8xf32>
    %158 = arith.subf %154, %157 : vector<8x8xf32>
    %159 = math.exp %158 : vector<8x8xf32>
    %cst_64 = arith.constant dense<0.000000e+00> : vector<8xf32>
    %160 = vector.multi_reduction <add>, %159, %cst_64 [1] : vector<8x8xf32> to vector<8xf32>
    %161 = vector.shape_cast %160 : vector<8xf32> to vector<8x1xf32>
    %162 = vector.broadcast %161 : vector<8x1xf32> to vector<8x8xf32>
    %163 = arith.divf %159, %162 : vector<8x8xf32>
    %cst_65 = arith.constant dense<0.000000e+00> : vector<8x8xf32>
    %164 = tpu.matmul %163, %150, %cst_65 {dimension_numbers = #tpu.dot_dimension_numbers<[1], [0], [0], [1], [0, 0, 1, 1], [], []>} : vector<8x8xf32>, vector<8x8xf32>, vector<8x8xf32> -> vector<8x8xf32>
    %165 = vector.extract_strided_slice %21 {offsets = [16, 0], sizes = [8, 32], strides = [1, 1]} : vector<32x32xf32> to vector<8x32xf32>
    %cst_66 = arith.constant dense<0.000000e+00> : vector<8x32xf32>
    %166 = tpu.matmul %164, %165, %cst_66 {dimension_numbers = #tpu.dot_dimension_numbers<[1], [0], [0], [1], [0, 0, 1, 1], [], []>} : vector<8x8xf32>, vector<8x32xf32>, vector<8x32xf32> -> vector<8x32xf32>
    %167 = arith.addf %147, %166 : vector<8x32xf32>
    %168 = vector.extract_strided_slice %7 {offsets = [8, 24], sizes = [8, 8], strides = [1, 1]} : vector<16x32xf32> to vector<8x8xf32>
    %169 = vector.extract_strided_slice %13 {offsets = [8, 24], sizes = [8, 8], strides = [1, 1]} : vector<16x32xf32> to vector<8x8xf32>
    %170 = vector.extract_strided_slice %19 {offsets = [8, 24], sizes = [8, 8], strides = [1, 1]} : vector<16x32xf32> to vector<8x8xf32>
    %cst_67 = arith.constant dense<0.000000e+00> : vector<8x8xf32>
    %171 = tpu.matmul %168, %169, %cst_67 {dimension_numbers = #tpu.dot_dimension_numbers<[1], [1], [0], [0], [0, 0, 1, 0], [], []>} : vector<8x8xf32>, vector<8x8xf32>, vector<8x8xf32> -> vector<8x8xf32>
    %172 = vector.extract_strided_slice %20 {offsets = [1, 3, 0, 0], sizes = [1, 1, 8, 8], strides = [1, 1, 1, 1]} : vector<2x4x8x8xf32> to vector<1x1x8x8xf32>
    %173 = vector.shape_cast %172 : vector<1x1x8x8xf32> to vector<8x8xf32>
    %174 = arith.addf %171, %173 : vector<8x8xf32>
    %cst_68 = arith.constant dense<0xFF800000> : vector<8xf32>
    %175 = vector.multi_reduction <maximumf>, %174, %cst_68 [1] : vector<8x8xf32> to vector<8xf32>
    %176 = vector.shape_cast %175 : vector<8xf32> to vector<8x1xf32>
    %177 = vector.broadcast %176 : vector<8x1xf32> to vector<8x8xf32>
    %178 = arith.subf %174, %177 : vector<8x8xf32>
    %179 = math.exp %178 : vector<8x8xf32>
    %cst_69 = arith.constant dense<0.000000e+00> : vector<8xf32>
    %180 = vector.multi_reduction <add>, %179, %cst_69 [1] : vector<8x8xf32> to vector<8xf32>
    %181 = vector.shape_cast %180 : vector<8xf32> to vector<8x1xf32>
    %182 = vector.broadcast %181 : vector<8x1xf32> to vector<8x8xf32>
    %183 = arith.divf %179, %182 : vector<8x8xf32>
    %cst_70 = arith.constant dense<0.000000e+00> : vector<8x8xf32>
    %184 = tpu.matmul %183, %170, %cst_70 {dimension_numbers = #tpu.dot_dimension_numbers<[1], [0], [0], [1], [0, 0, 1, 1], [], []>} : vector<8x8xf32>, vector<8x8xf32>, vector<8x8xf32> -> vector<8x8xf32>
    %185 = vector.extract_strided_slice %21 {offsets = [24, 0], sizes = [8, 32], strides = [1, 1]} : vector<32x32xf32> to vector<8x32xf32>
    %cst_71 = arith.constant dense<0.000000e+00> : vector<8x32xf32>
    %186 = tpu.matmul %184, %185, %cst_71 {dimension_numbers = #tpu.dot_dimension_numbers<[1], [0], [0], [1], [0, 0, 1, 1], [], []>} : vector<8x8xf32>, vector<8x32xf32>, vector<8x32xf32> -> vector<8x32xf32>
    %187 = arith.addf %167, %186 : vector<8x32xf32>
    %188 = vector.broadcast %22 : vector<1x32xf32> to vector<8x32xf32>
    %189 = arith.addf %187, %188 : vector<8x32xf32>
    %c8 = arith.constant 8 : index
    %c0_72 = arith.constant 0 : index
    %190 = vector.load %arg13[%c8, %c0_72] : memref<16x32xf32, #tpu.memory_space<vmem>>, vector<8x32xf32>
    tpu.vector_store %arg13[%c8, %c0_72], %189 {strides = array<i32>} : memref<16x32xf32, #tpu.memory_space<vmem>>, vector<8x32xf32>,
    return
  }
  func.func @transform_0(%arg0: i32) -> (i32, i32) {
    %c0_i32 = arith.constant 0 : i32
    %c0_i32_0 = arith.constant 0 : i32
    %c0_i32_1 = arith.constant 0 : i32
    return %c0_i32, %c0_i32_0 : i32, i32
  }
  func.func @transform_1(%arg0: i32) -> (i32, i32) {
    %c0_i32 = arith.constant 0 : i32
    %c0_i32_0 = arith.constant 0 : i32
    %c0_i32_1 = arith.constant 0 : i32
    return %c0_i32, %c0_i32_0 : i32, i32
  }
  func.func @transform_2(%arg0: i32) -> (i32, i32) {
    %c0_i32 = arith.constant 0 : i32
    %c0_i32_0 = arith.constant 0 : i32
    %c0_i32_1 = arith.constant 0 : i32
    return %c0_i32, %c0_i32_0 : i32, i32
  }
  func.func @transform_3(%arg0: i32) -> (i32, i32, i32, i32) {
    %c0_i32 = arith.constant 0 : i32
    %c0_i32_0 = arith.constant 0 : i32
    %c0_i32_1 = arith.constant 0 : i32
    %c0_i32_2 = arith.constant 0 : i32
    %c0_i32_3 = arith.constant 0 : i32
    return %c0_i32, %c0_i32_0, %c0_i32_1, %c0_i32_2 : i32, i32, i32, i32
  }
  func.func @transform_4(%arg0: i32) -> (i32, i32) {
    %c0_i32 = arith.constant 0 : i32
    %c0_i32_0 = arith.constant 0 : i32
    %c0_i32_1 = arith.constant 0 : i32
    return %c0_i32, %c0_i32_0 : i32, i32
  }
  func.func @transform_5(%arg0: i32) -> (i32, i32) {
    %c0_i32 = arith.constant 0 : i32
    %c0_i32_0 = arith.constant 0 : i32
    %c0_i32_1 = arith.constant 0 : i32
    return %c0_i32, %c0_i32_0 : i32, i32
  }
  func.func @transform_6(%arg0: i32) -> (i32, i32) {
    %c0_i32 = arith.constant 0 : i32
    %c0_i32_0 = arith.constant 0 : i32
    %c0_i32_1 = arith.constant 0 : i32
    return %c0_i32, %c0_i32_0 : i32, i32
  }
  func.func @transform_7(%arg0: i32) -> (i32, i32) {
    %c0_i32 = arith.constant 0 : i32
    %c0_i32_0 = arith.constant 0 : i32
    %c0_i32_1 = arith.constant 0 : i32
    return %c0_i32, %c0_i32_0 : i32, i32
  }
  func.func @transform_8(%arg0: i32) -> (i32, i32) {
    %c0_i32 = arith.constant 0 : i32
    %c0_i32_0 = arith.constant 0 : i32
    %c0_i32_1 = arith.constant 0 : i32
    return %c0_i32, %c0_i32_0 : i32, i32
  }
  func.func @transform_9(%arg0: i32) -> (i32, i32) {
    %c0_i32 = arith.constant 0 : i32
    %c0_i32_0 = arith.constant 0 : i32
    %c0_i32_1 = arith.constant 0 : i32
    return %c0_i32, %c0_i32_0 : i32, i32
  }
  func.func @transform_10(%arg0: i32) -> (i32, i32) {
    %c0_i32 = arith.constant 0 : i32
    %c0_i32_0 = arith.constant 0 : i32
    %c0_i32_1 = arith.constant 0 : i32
    return %c0_i32, %c0_i32_0 : i32, i32
  }
  func.func @transform_11(%arg0: i32) -> (i32, i32) {
    %c0_i32 = arith.constant 0 : i32
    %c0_i32_0 = arith.constant 0 : i32
    %c0_i32_1 = arith.constant 0 : i32
    return %c0_i32, %c0_i32_0 : i32, i32
  }
  func.func @transform_12(%arg0: i32) -> (i32, i32) {
    %c0_i32 = arith.constant 0 : i32
    %c0_i32_0 = arith.constant 0 : i32
    %c0_i32_1 = arith.constant 0 : i32
    return %c0_i32, %c0_i32_0 : i32, i32
  }
}

</mosaic_0001>

<llo_original>
// kernel: tpu_custom_call.1
$region0: #{tpu_custom_call.1}
  #allocation0 [shape = 'u32[]', space=smem, size = 0x4, offset = 0x4, fixed_abs, tag = 'smem constant byte address 0x4 - core index']
  #allocation1 [shape = 'u32[144,128]{1,0:T(1,128)}', space=vmem, size = 0x12000, scoped, tag = 'internal scratch']
  %s0 = inlined_call_operand.hbm [shape: f32[16,32], index: 0, kind: input, shape index: {}]
  %s1 = inlined_call_operand.hbm [shape: f32[16,32], index: 1, kind: input, shape index: {}]
  %s2 = inlined_call_operand.hbm [shape: f32[16,32], index: 2, kind: input, shape index: {}]
  %s3 = inlined_call_operand.hbm [shape: f32[2,4,8,8], index: 3, kind: input, shape index: {}]
  %s4 = inlined_call_operand.hbm [shape: f32[32,32], index: 4, kind: input, shape index: {}]
  %s5 = inlined_call_operand.vmem [shape: f32[1,32], index: 5, kind: input, shape index: {}]
  %s6 = inlined_call_operand.hbm [shape: f32[32,32], index: 6, kind: input, shape index: {}]
  %s7 = inlined_call_operand.vmem [shape: f32[1,32], index: 7, kind: input, shape index: {}]
  %s8 = inlined_call_operand.hbm [shape: f32[32,32], index: 8, kind: input, shape index: {}]
  %s9 = inlined_call_operand.vmem [shape: f32[1,32], index: 9, kind: input, shape index: {}]
  %s10 = inlined_call_operand.vmem [shape: f32[32,32], index: 10, kind: input, shape index: {}]
  %s11 = inlined_call_operand.vmem [shape: f32[1,32], index: 11, kind: input, shape index: {}]
  %s12 = inlined_call_operand.hbm [shape: f32[16,32], index: 12, kind: output, shape index: {}]
  %s13 = sld [smem:[#allocation0]]
  $region86: #{tpu_custom_call.1} parent=0
    _
  %s15 = ssub.s32 1, %s13
  %s16 = scalar_select 0, %s15, %s13
  $region1: #{tpu_custom_call.1} parent=0
    #allocation2 [shape = 'u8[8192]{0}', space=vmem, size = 0x2000, scoped, tag = 'input window, operand 0, single buffered']
    #allocation3 [shape = 's32[1]{0}', space=sflag, size = 0x4, scoped, tag = 'scoped memory for tpu_custom_call.1']
    #allocation4 [shape = 's32[1]{0}', space=sflag, size = 0x4, scoped, tag = 'scoped memory for tpu_custom_call.1']
    #allocation5 [shape = 'u8[8192]{0}', space=vmem, size = 0x2000, scoped, tag = 'input window, operand 1, single buffered']
    #allocation6 [shape = 's32[1]{0}', space=sflag, size = 0x4, scoped, tag = 'scoped memory for tpu_custom_call.1']
    #allocation7 [shape = 'u8[8192]{0}', space=vmem, size = 0x2000, scoped, tag = 'input window, operand 2, single buffered']
    #allocation8 [shape = 'u8[32768]{0}', space=vmem, size = 0x8000, scoped, tag = 'input window, operand 3, single buffered']
    #allocation9 [shape = 's32[1]{0}', space=sflag, size = 0x4, scoped, tag = 'scoped memory for tpu_custom_call.1']
    #allocation10 [shape = 'u8[16384]{0}', space=vmem, size = 0x4000, scoped, tag = 'input window, operand 4, single buffered']
    #allocation11 [shape = 'u8[16384]{0}', space=vmem, size = 0x4000, scoped, tag = 'input window, operand 6, single buffered']
    #allocation12 [shape = 's32[1]{0}', space=sflag, size = 0x4, scoped, tag = 'scoped memory for tpu_custom_call.1']
    #allocation13 [shape = 'u8[16384]{0}', space=vmem, size = 0x4000, scoped, tag = 'input window, operand 8, single buffered']
    #allocation14 [shape = 'u8[8192]{0}', space=vmem, size = 0x2000, scoped, tag = 'output window, operand 0, single buffered']
    %17 = vsyncpa [#allocation3], 0
    %18 = vsyncpa [#allocation6], 0
    %19 = vsyncpa [#allocation9], 0
    %20 = vsyncpa [#allocation12], 0
    %21 = vsyncpa [#allocation4], 0
    // Predicated region
    $region2: #{tpu_custom_call.1} parent=1 // pred_check
      _
    $region3: #{tpu_custom_call.1} parent=1 // pred_check_branch
      %23 = sbr.rel (0) target = $region5
    $region4: #{tpu_custom_call.1} parent=1 // pred_region
      %s25 = ssub.s32 256, 256
      %26 = vsyncadd [#allocation3], %s25
      %s27 = sshll.u32 [#allocation2], 4
      %s28 = int_to_ptr.vmem [resolvable:$true] %s27
      %33 = dma.hbm_to_vmem [thread:$0]  %s0, 256, %s28, [#allocation3], 128, 128, 8
    $region5: #{tpu_custom_call.1} parent=1 // pred_fallthru
      _
    // Predicated region
    $region6: #{tpu_custom_call.1} parent=1 // pred_check
      _
    $region7: #{tpu_custom_call.1} parent=1 // pred_check_branch
      %35 = sbr.rel (0) target = $region9
    $region8: #{tpu_custom_call.1} parent=1 // pred_region
      %s37 = ssub.s32 256, 256
      %38 = vsyncadd [#allocation6], %s37
      %s39 = sshll.u32 [#allocation5], 4
      %s40 = int_to_ptr.vmem [resolvable:$true] %s39
      %45 = dma.hbm_to_vmem [thread:$0]  %s1, 256, %s40, [#allocation6], 128, 128, 8
    $region9: #{tpu_custom_call.1} parent=1 // pred_fallthru
      _
    // Predicated region
    $region10: #{tpu_custom_call.1} parent=1 // pred_check
      _
    $region11: #{tpu_custom_call.1} parent=1 // pred_check_branch
      %47 = sbr.rel (0) target = $region13
    $region12: #{tpu_custom_call.1} parent=1 // pred_region
      %s49 = ssub.s32 256, 256
      %50 = vsyncadd [#allocation6], %s49
      %s51 = sshll.u32 [#allocation7], 4
      %s52 = int_to_ptr.vmem [resolvable:$true] %s51
      %57 = dma.hbm_to_vmem [thread:$0]  %s2, 256, %s52, [#allocation6], 128, 128, 8
    $region13: #{tpu_custom_call.1} parent=1 // pred_fallthru
      _
    // Predicated region
    $region14: #{tpu_custom_call.1} parent=1 // pred_check
      _
    $region15: #{tpu_custom_call.1} parent=1 // pred_check_branch
      %59 = sbr.rel (0) target = $region17
    $region16: #{tpu_custom_call.1} parent=1 // pred_region
      %s61 = ssub.s32 1024, 1024
      %62 = vsyncadd [#allocation9], %s61
      %s63 = sshll.u32 [#allocation8], 4
      %s64 = int_to_ptr.vmem [resolvable:$true] %s63
      %69 = dma.hbm_to_vmem [thread:$0]  %s3, 1024, %s64, [#allocation9], 128, 128, 8
    $region17: #{tpu_custom_call.1} parent=1 // pred_fallthru
      _
    // Predicated region
    $region18: #{tpu_custom_call.1} parent=1 // pred_check
      _
    $region19: #{tpu_custom_call.1} parent=1 // pred_check_branch
      %71 = sbr.rel (0) target = $region21
    $region20: #{tpu_custom_call.1} parent=1 // pred_region
      %s73 = ssub.s32 512, 512
      %74 = vsyncadd [#allocation9], %s73
      %s75 = sshll.u32 [#allocation10], 4
      %s76 = int_to_ptr.vmem [resolvable:$true] %s75
      %81 = dma.hbm_to_vmem [thread:$0]  %s4, 512, %s76, [#allocation9], 128, 128, 8
    $region21: #{tpu_custom_call.1} parent=1 // pred_fallthru
      _
    // Predicated region
    $region22: #{tpu_custom_call.1} parent=1 // pred_check
      _
    $region23: #{tpu_custom_call.1} parent=1 // pred_check_branch
      %83 = sbr.rel (0) target = $region25
    $region24: #{tpu_custom_call.1} parent=1 // pred_region
      _
    $region25: #{tpu_custom_call.1} parent=1 // pred_fallthru
      _
    // Predicated region
    $region26: #{tpu_custom_call.1} parent=1 // pred_check
      _
    $region27: #{tpu_custom_call.1} parent=1 // pred_check_branch
      %85 = sbr.rel (0) target = $region29
    $region28: #{tpu_custom_call.1} parent=1 // pred_region
      %s87 = ssub.s32 512, 512
      %88 = vsyncadd [#allocation12], %s87
      %s89 = sshll.u32 [#allocation11], 4
      %s90 = int_to_ptr.vmem [resolvable:$true] %s89
      %95 = dma.hbm_to_vmem [thread:$0]  %s6, 512, %s90, [#allocation12], 128, 128, 8
    $region29: #{tpu_custom_call.1} parent=1 // pred_fallthru
      _
    // Predicated region
    $region30: #{tpu_custom_call.1} parent=1 // pred_check
      _
    $region31: #{tpu_custom_call.1} parent=1 // pred_check_branch
      %97 = sbr.rel (0) target = $region33
    $region32: #{tpu_custom_call.1} parent=1 // pred_region
      _
    $region33: #{tpu_custom_call.1} parent=1 // pred_fallthru
      _
    // Predicated region
    $region34: #{tpu_custom_call.1} parent=1 // pred_check
      _
    $region35: #{tpu_custom_call.1} parent=1 // pred_check_branch
      %99 = sbr.rel (0) target = $region37
    $region36: #{tpu_custom_call.1} parent=1 // pred_region
      %s101 = ssub.s32 512, 512
      %102 = vsyncadd [#allocation12], %s101
      %s103 = sshll.u32 [#allocation13], 4
      %s104 = int_to_ptr.vmem [resolvable:$true] %s103
      %109 = dma.hbm_to_vmem [thread:$0]  %s8, 512, %s104, [#allocation12], 128, 128, 8
    $region37: #{tpu_custom_call.1} parent=1 // pred_fallthru
      _
    // Predicated region
    $region38: #{tpu_custom_call.1} parent=1 // pred_check
      _
    $region39: #{tpu_custom_call.1} parent=1 // pred_check_branch
      %111 = sbr.rel (0) target = $region41
    $region40: #{tpu_custom_call.1} parent=1 // pred_region
      _
    $region41: #{tpu_custom_call.1} parent=1 // pred_fallthru
      _
    // Predicated region
    $region42: #{tpu_custom_call.1} parent=1 // pred_check
      _
    $region43: #{tpu_custom_call.1} parent=1 // pred_check_branch
      %113 = sbr.rel (0) target = $region45
    $region44: #{tpu_custom_call.1} parent=1 // pred_region
      _
    $region45: #{tpu_custom_call.1} parent=1 // pred_fallthru
      _
    // Predicated region
    $region46: #{tpu_custom_call.1} parent=1 // pred_check
      _
    $region47: #{tpu_custom_call.1} parent=1 // pred_check_branch
      %115 = sbr.rel (0) target = $region49
    $region48: #{tpu_custom_call.1} parent=1 // pred_region
      _
    $region49: #{tpu_custom_call.1} parent=1 // pred_fallthru
      _
    // Predicated region
    $region50: #{tpu_custom_call.1} parent=1 // pred_check
      _
    $region51: #{tpu_custom_call.1} parent=1 // pred_check_branch
      %117 = sbr.rel (0) target = $region53
    $region52: #{tpu_custom_call.1} parent=1 // pred_region
      %118 = dma.done [#allocation3], 256
    $region53: #{tpu_custom_call.1} parent=1 // pred_fallthru
      _
    // Predicated region
    $region54: #{tpu_custom_call.1} parent=1 // pred_check
      _
    $region55: #{tpu_custom_call.1} parent=1 // pred_check_branch
      %120 = sbr.rel (0) target = $region57
    $region56: #{tpu_custom_call.1} parent=1 // pred_region
      %121 = dma.done [#allocation6], 256
    $region57: #{tpu_custom_call.1} parent=1 // pred_fallthru
      _
    // Predicated region
    $region58: #{tpu_custom_call.1} parent=1 // pred_check
      _
    $region59: #{tpu_custom_call.1} parent=1 // pred_check_branch
      %123 = sbr.rel (0) target = $region61
    $region60: #{tpu_custom_call.1} parent=1 // pred_region
      %124 = dma.done [#allocation6], 256
    $region61: #{tpu_custom_call.1} parent=1 // pred_fallthru
      _
    // Predicated region
    $region62: #{tpu_custom_call.1} parent=1 // pred_check
      _
    $region63: #{tpu_custom_call.1} parent=1 // pred_check_branch
      %126 = sbr.rel (0) target = $region65
    $region64: #{tpu_custom_call.1} parent=1 // pred_region
      %127 = dma.done [#allocation9], 1024
    $region65: #{tpu_custom_call.1} parent=1 // pred_fallthru
      _
    // Predicated region
    $region66: #{tpu_custom_call.1} parent=1 // pred_check
      _
    $region67: #{tpu_custom_call.1} parent=1 // pred_check_branch
      %129 = sbr.rel (0) target = $region69
    $region68: #{tpu_custom_call.1} parent=1 // pred_region
      %130 = dma.done [#allocation9], 512
    $region69: #{tpu_custom_call.1} parent=1 // pred_fallthru
      _
    // Predicated region
    $region70: #{tpu_custom_call.1} parent=1 // pred_check
      _
    $region71: #{tpu_custom_call.1} parent=1 // pred_check_branch
      %132 = sbr.rel (0) target = $region73
    $region72: #{tpu_custom_call.1} parent=1 // pred_region
      %133 = dma.done [#allocation12], 512
    $region73: #{tpu_custom_call.1} parent=1 // pred_fallthru
      _
    // Predicated region
    $region74: #{tpu_custom_call.1} parent=1 // pred_check
      _
    $region75: #{tpu_custom_call.1} parent=1 // pred_check_branch
      %135 = sbr.rel (0) target = $region77
    $region76: #{tpu_custom_call.1} parent=1 // pred_region
      %136 = dma.done [#allocation12], 512
    $region77: #{tpu_custom_call.1} parent=1 // pred_fallthru
      _
    %v137 = vld [vmem:[#allocation2] sm:$0xff]
    %v138 = vld [vmem:[#allocation2 + $0x8] sm:$0xff]
    %v139 = vld [vmem:[#allocation10] sm:$0xff]
    %v140 = vld [vmem:[#allocation10 + $0x8] sm:$0xff]
    %v141 = vld [vmem:[#allocation10 + $0x10] sm:$0xff]
    %v142 = vld [vmem:[#allocation10 + $0x18] sm:$0xff]
    %v143 = vld [vmem:[%s5] sm:$0x1]
    %v145 = vlaneseq
    %v146 = vshrl.u32 %v145, 7
    %v147 = vsub.s32 0, %v146
    %v148 = vrot.slane %v143, %v147
    %vm150 = vcmask 261120
    %v152 = vsel %vm150, %v137, 0
    %v155 = vsel %vm150, %v138, 0
    %157 = vmatprep.subr.mxu0 0.0
    %158 = vmatpush1.msra.mxu0 %v139
    %159 = vmatprep.subr.mxu0 0.0
    %160 = vmatpush1.msra.mxu0 %v140
    %161 = vmatprep.subr.mxu0 0.0
    %162 = vmatpush1.msra.mxu0 %v141
    %163 = vmatprep.subr.mxu0 0.0
    %164 = vmatpush1.msra.mxu0 %v142
    %165 = vmatprep.subr.mxu0 0.0
    %166 = vmatpush1.msra.mxu0 0.0
    %167 = vmatprep.subr.mxu0 0.0
    %168 = vmatpush1.msra.mxu0 0.0
    %169 = vmatprep.subr.mxu0 0.0
    %170 = vmatpush1.msra.mxu0 0.0
    %171 = vmatprep.subr.mxu0 0.0
    %172 = vmatpush1.msra.mxu0 0.0
    %173 = vmatprep.subr.mxu0 0.0
    %174 = vmatpush1.msra.mxu0 0.0
    %175 = vmatprep.subr.mxu0 0.0
    %176 = vmatpush1.msra.mxu0 0.0
    %177 = vmatprep.subr.mxu0 0.0
    %178 = vmatpush1.msra.mxu0 0.0
    %179 = vmatprep.subr.mxu0 0.0
    %180 = vmatpush1.msra.mxu0 0.0
    %181 = vmatprep.subr.mxu0 0.0
    %182 = vmatpush1.msra.mxu0 0.0
    %183 = vmatprep.subr.mxu0 0.0
    %184 = vmatpush1.msra.mxu0 0.0
    %185 = vmatprep.subr.mxu0 0.0
    %186 = vmatpush1.msra.mxu0 0.0
    %187 = vmatprep.subr.mxu0 0.0
    %188 = vmatpush1.msra.mxu0 0.0
    %189 = vmatprep.subr.mxu0 0.0
    %190 = vmatpush1.msra.mxu0 0.0
    %191 = vmatprep.subr.mxu0 0.0
    %192 = vmatpush1.msra.mxu0 0.0
    %193 = vmatprep.subr.mxu0 0.0
    %194 = vmatpush1.msra.mxu0 0.0
    %195 = vmatprep.subr.mxu0 0.0
    %196 = vmatpush1.msra.mxu0 0.0
    %197 = vmatprep.subr.mxu0 0.0
    %198 = vmatpush1.msra.mxu0 0.0
    %199 = vmatprep.subr.mxu0 0.0
    %200 = vmatpush1.msra.mxu0 0.0
    %201 = vmatprep.subr.mxu0 0.0
    %202 = vmatpush1.msra.mxu0 0.0
    %203 = vmatprep.subr.mxu0 0.0
    %204 = vmatpush1.msra.mxu0 0.0
    %205 = vmatprep.subr.mxu0 0.0
    %206 = vmatpush1.msra.mxu0 0.0
    %207 = vmatprep.subr.mxu0 0.0
    %208 = vmatpush1.msra.mxu0 0.0
    %209 = vmatprep.subr.mxu0 0.0
    %210 = vmatpush1.msra.mxu0 0.0
    %211 = vmatprep.subr.mxu0 0.0
    %212 = vmatpush1.msra.mxu0 0.0
    %213 = vmatprep.subr.mxu0 0.0
    %214 = vmatpush1.msra.mxu0 0.0
    %215 = vmatprep.subr.mxu0 0.0
    %216 = vmatpush1.msra.mxu0 0.0
    %217 = vmatprep.subr.mxu0 0.0
    %218 = vmatpush1.msra.mxu0 0.0
    %219 = vmatprep.subr.mxu0 0.0
    %220 = vmatpush1.msra.mxu0 0.0
    %221 = vmatprep.mubr.f32.mxu0 0.0
    %222 = vmatmul.mubr.f32.gmra.mrb[0].mxu0 %v152
    %v223 = vpop.f32.mrb[0].mxu0
    %v224 = vadd.f32 %v148, %v223
    %v225 = vpop.f32.mrb[0].mxu0
    %226 = vmatprep.mubr.f32.mxu0 0.0
    %227 = vmatmul.mubr.f32.gmra.mrb[0].mxu0 %v155
    %v228 = vpop.f32.mrb[0].mxu0
    %v229 = vadd.f32 %v148, %v228
    %v230 = vpop.f32.mrb[0].mxu0
    %231 = vdwg.mxu0
    %v232 = vmul.f32 %v224, 0.35355338
    %v233 = vmul.f32 %v229, 0.35355338
    %v234 = vld [vmem:[#allocation5] sm:$0xff]
    %v235 = vld [vmem:[#allocation5 + $0x8] sm:$0xff]
    %v236 = vld [vmem:[#allocation11] sm:$0xff]
    %v237 = vld [vmem:[#allocation11 + $0x8] sm:$0xff]
    %v238 = vld [vmem:[#allocation11 + $0x10] sm:$0xff]
    %v239 = vld [vmem:[#allocation11 + $0x18] sm:$0xff]
    %v240 = vld [vmem:[%s7] sm:$0x1]
    %v242 = vlaneseq
    %v243 = vshrl.u32 %v242, 7
    %v244 = vsub.s32 0, %v243
    %v245 = vrot.slane %v240, %v244
    %v248 = vsel %vm150, %v234, 0
    %v251 = vsel %vm150, %v235, 0
    %253 = vmatprep.subr.mxu0 0.0
    %254 = vmatpush1.msra.mxu0 %v236
    %255 = vmatprep.subr.mxu0 0.0
    %256 = vmatpush1.msra.mxu0 %v237
    %257 = vmatprep.subr.mxu0 0.0
    %258 = vmatpush1.msra.mxu0 %v238
    %259 = vmatprep.subr.mxu0 0.0
    %260 = vmatpush1.msra.mxu0 %v239
    %261 = vmatprep.subr.mxu0 0.0
    %262 = vmatpush1.msra.mxu0 0.0
    %263 = vmatprep.subr.mxu0 0.0
    %264 = vmatpush1.msra.mxu0 0.0
    %265 = vmatprep.subr.mxu0 0.0
    %266 = vmatpush1.msra.mxu0 0.0
    %267 = vmatprep.subr.mxu0 0.0
    %268 = vmatpush1.msra.mxu0 0.0
    %269 = vmatprep.subr.mxu0 0.0
    %270 = vmatpush1.msra.mxu0 0.0
    %271 = vmatprep.subr.mxu0 0.0
    %272 = vmatpush1.msra.mxu0 0.0
    %273 = vmatprep.subr.mxu0 0.0
    %274 = vmatpush1.msra.mxu0 0.0
    %275 = vmatprep.subr.mxu0 0.0
    %276 = vmatpush1.msra.mxu0 0.0
    %277 = vmatprep.subr.mxu0 0.0
    %278 = vmatpush1.msra.mxu0 0.0
    %279 = vmatprep.subr.mxu0 0.0
    %280 = vmatpush1.msra.mxu0 0.0
    %281 = vmatprep.subr.mxu0 0.0
    %282 = vmatpush1.msra.mxu0 0.0
    %283 = vmatprep.subr.mxu0 0.0
    %284 = vmatpush1.msra.mxu0 0.0
    %285 = vmatprep.subr.mxu0 0.0
    %286 = vmatpush1.msra.mxu0 0.0
    %287 = vmatprep.subr.mxu0 0.0
    %288 = vmatpush1.msra.mxu0 0.0
    %289 = vmatprep.subr.mxu0 0.0
    %290 = vmatpush1.msra.mxu0 0.0
    %291 = vmatprep.subr.mxu0 0.0
    %292 = vmatpush1.msra.mxu0 0.0
    %293 = vmatprep.subr.mxu0 0.0
    %294 = vmatpush1.msra.mxu0 0.0
    %295 = vmatprep.subr.mxu0 0.0
    %296 = vmatpush1.msra.mxu0 0.0
    %297 = vmatprep.subr.mxu0 0.0
    %298 = vmatpush1.msra.mxu0 0.0
    %299 = vmatprep.subr.mxu0 0.0
    %300 = vmatpush1.msra.mxu0 0.0
    %301 = vmatprep.subr.mxu0 0.0
    %302 = vmatpush1.msra.mxu0 0.0
    %303 = vmatprep.subr.mxu0 0.0
    %304 = vmatpush1.msra.mxu0 0.0
    %305 = vmatprep.subr.mxu0 0.0
    %306 = vmatpush1.msra.mxu0 0.0
    %307 = vmatprep.subr.mxu0 0.0
    %308 = vmatpush1.msra.mxu0 0.0
    %309 = vmatprep.subr.mxu0 0.0
    %310 = vmatpush1.msra.mxu0 0.0
    %311 = vmatprep.subr.mxu0 0.0
    %312 = vmatpush1.msra.mxu0 0.0
    %313 = vmatprep.subr.mxu0 0.0
    %314 = vmatpush1.msra.mxu0 0.0
    %315 = vmatprep.subr.mxu0 0.0
    %316 = vmatpush1.msra.mxu0 0.0
    %317 = vmatprep.mubr.f32.mxu0 0.0
    %318 = vmatmul.mubr.f32.gmra.mrb[0].mxu0 %v248
    %v319 = vpop.f32.mrb[0].mxu0
    %v320 = vadd.f32 %v245, %v319
    %v321 = vpop.f32.mrb[0].mxu0
    %322 = vmatprep.mubr.f32.mxu0 0.0
    %323 = vmatmul.mubr.f32.gmra.mrb[0].mxu0 %v251
    %v324 = vpop.f32.mrb[0].mxu0
    %v325 = vadd.f32 %v245, %v324
    %v326 = vpop.f32.mrb[0].mxu0
    %327 = vdwg.mxu0
    %v328 = vld [vmem:[#allocation7] sm:$0xff]
    %v329 = vld [vmem:[#allocation7 + $0x8] sm:$0xff]
    %v330 = vld [vmem:[#allocation13] sm:$0xff]
    %v331 = vld [vmem:[#allocation13 + $0x8] sm:$0xff]
    %v332 = vld [vmem:[#allocation13 + $0x10] sm:$0xff]
    %v333 = vld [vmem:[#allocation13 + $0x18] sm:$0xff]
    %v334 = vld [vmem:[%s9] sm:$0x1]
    %v336 = vlaneseq
    %v337 = vshrl.u32 %v336, 7
    %v338 = vsub.s32 0, %v337
    %v339 = vrot.slane %v334, %v338
    %v342 = vsel %vm150, %v328, 0
    %v345 = vsel %vm150, %v329, 0
    %347 = vmatprep.subr.mxu0 0.0
    %348 = vmatpush1.msra.mxu0 %v330
    %349 = vmatprep.subr.mxu0 0.0
    %350 = vmatpush1.msra.mxu0 %v331
    %351 = vmatprep.subr.mxu0 0.0
    %352 = vmatpush1.msra.mxu0 %v332
    %353 = vmatprep.subr.mxu0 0.0
    %354 = vmatpush1.msra.mxu0 %v333
    %355 = vmatprep.subr.mxu0 0.0
    %356 = vmatpush1.msra.mxu0 0.0
    %357 = vmatprep.subr.mxu0 0.0
    %358 = vmatpush1.msra.mxu0 0.0
    %359 = vmatprep.subr.mxu0 0.0
    %360 = vmatpush1.msra.mxu0 0.0
    %361 = vmatprep.subr.mxu0 0.0
    %362 = vmatpush1.msra.mxu0 0.0
    %363 = vmatprep.subr.mxu0 0.0
    %364 = vmatpush1.msra.mxu0 0.0
    %365 = vmatprep.subr.mxu0 0.0
    %366 = vmatpush1.msra.mxu0 0.0
    %367 = vmatprep.subr.mxu0 0.0
    %368 = vmatpush1.msra.mxu0 0.0
    %369 = vmatprep.subr.mxu0 0.0
    %370 = vmatpush1.msra.mxu0 0.0
    %371 = vmatprep.subr.mxu0 0.0
    %372 = vmatpush1.msra.mxu0 0.0
    %373 = vmatprep.subr.mxu0 0.0
    %374 = vmatpush1.msra.mxu0 0.0
    %375 = vmatprep.subr.mxu0 0.0
    %376 = vmatpush1.msra.mxu0 0.0
    %377 = vmatprep.subr.mxu0 0.0
    %378 = vmatpush1.msra.mxu0 0.0
    %379 = vmatprep.subr.mxu0 0.0
    %380 = vmatpush1.msra.mxu0 0.0
    %381 = vmatprep.subr.mxu0 0.0
    %382 = vmatpush1.msra.mxu0 0.0
    %383 = vmatprep.subr.mxu0 0.0
    %384 = vmatpush1.msra.mxu0 0.0
    %385 = vmatprep.subr.mxu0 0.0
    %386 = vmatpush1.msra.mxu0 0.0
    %387 = vmatprep.subr.mxu0 0.0
    %388 = vmatpush1.msra.mxu0 0.0
    %389 = vmatprep.subr.mxu0 0.0
    %390 = vmatpush1.msra.mxu0 0.0
    %391 = vmatprep.subr.mxu0 0.0
    %392 = vmatpush1.msra.mxu0 0.0
    %393 = vmatprep.subr.mxu0 0.0
    %394 = vmatpush1.msra.mxu0 0.0
    %395 = vmatprep.subr.mxu0 0.0
    %396 = vmatpush1.msra.mxu0 0.0
    %397 = vmatprep.subr.mxu0 0.0
    %398 = vmatpush1.msra.mxu0 0.0
    %399 = vmatprep.subr.mxu0 0.0
    %400 = vmatpush1.msra.mxu0 0.0
    %401 = vmatprep.subr.mxu0 0.0
    %402 = vmatpush1.msra.mxu0 0.0
    %403 = vmatprep.subr.mxu0 0.0
    %404 = vmatpush1.msra.mxu0 0.0
    %405 = vmatprep.subr.mxu0 0.0
    %406 = vmatpush1.msra.mxu0 0.0
    %407 = vmatprep.subr.mxu0 0.0
    %408 = vmatpush1.msra.mxu0 0.0
    %409 = vmatprep.subr.mxu0 0.0
    %410 = vmatpush1.msra.mxu0 0.0
    %411 = vmatprep.mubr.f32.mxu0 0.0
    %412 = vmatmul.mubr.f32.gmra.mrb[0].mxu0 %v342
    %v413 = vpop.f32.mrb[0].mxu0
    %v414 = vadd.f32 %v339, %v413
    %v415 = vpop.f32.mrb[0].mxu0
    %416 = vmatprep.mubr.f32.mxu0 0.0
    %417 = vmatmul.mubr.f32.gmra.mrb[0].mxu0 %v345
    %v418 = vpop.f32.mrb[0].mxu0
    %v419 = vadd.f32 %v339, %v418
    %v420 = vpop.f32.mrb[0].mxu0
    %421 = vdwg.mxu0
    %v422 = vld [vmem:[#allocation8] sm:$0xff]
    %v423 = vld [vmem:[#allocation8 + $0x8] sm:$0xff]
    %v424 = vld [vmem:[#allocation8 + $0x10] sm:$0xff]
    %v425 = vld [vmem:[#allocation8 + $0x18] sm:$0xff]
    %v426 = vld [vmem:[#allocation8 + $0x20] sm:$0xff]
    %v427 = vld [vmem:[#allocation8 + $0x28] sm:$0xff]
    %v428 = vld [vmem:[#allocation8 + $0x30] sm:$0xff]
    %v429 = vld [vmem:[#allocation8 + $0x38] sm:$0xff]
    %v430 = vld [vmem:[%s10] sm:$0xff]
    %v431 = vld [vmem:[%s10 + $0x8] sm:$0xff]
    %v432 = vld [vmem:[%s10 + $0x10] sm:$0xff]
    %v433 = vld [vmem:[%s10 + $0x18] sm:$0xff]
    %v434 = vld [vmem:[%s11] sm:$0x1]
    %vm435 = vcmask 64512
    %v437 = vsel %vm435, %v232, 0
    %v440 = vsel %vm435, %v320, 0
    %442 = vmatprep.subr.mxu0 0.0
    %443 = vmatpush1.xpose.msra.mxu0 %v440
    %444 = vmatprep.subr.mxu0 0.0
    %445 = vmatpush1.xpose.msra.mxu0 0.0
    %446 = vmatprep.subr.mxu0 0.0
    %447 = vmatpush1.xpose.msra.mxu0 0.0
    %448 = vmatprep.subr.mxu0 0.0
    %449 = vmatpush1.xpose.msra.mxu0 0.0
    %450 = vmatprep.subr.mxu0 0.0
    %451 = vmatpush1.xpose.msra.mxu0 0.0
    %452 = vmatprep.subr.mxu0 0.0
    %453 = vmatpush1.xpose.msra.mxu0 0.0
    %454 = vmatprep.subr.mxu0 0.0
    %455 = vmatpush1.xpose.msra.mxu0 0.0
    %456 = vmatprep.subr.mxu0 0.0
    %457 = vmatpush1.xpose.msra.mxu0 0.0
    %458 = vmatprep.subr.mxu0 0.0
    %459 = vmatpush1.xpose.msra.mxu0 0.0
    %460 = vmatprep.subr.mxu0 0.0
    %461 = vmatpush1.xpose.msra.mxu0 0.0
    %462 = vmatprep.subr.mxu0 0.0
    %463 = vmatpush1.xpose.msra.mxu0 0.0
    %464 = vmatprep.subr.mxu0 0.0
    %465 = vmatpush1.xpose.msra.mxu0 0.0
    %466 = vmatprep.subr.mxu0 0.0
    %467 = vmatpush1.xpose.msra.mxu0 0.0
    %468 = vmatprep.subr.mxu0 0.0
    %469 = vmatpush1.xpose.msra.mxu0 0.0
    %470 = vmatprep.subr.mxu0 0.0
    %471 = vmatpush1.xpose.msra.mxu0 0.0
    %472 = vmatprep.subr.mxu0 0.0
    %473 = vmatpush1.xpose.msra.mxu0 0.0
    %474 = vmatprep.subr.mxu0 0.0
    %475 = vmatpush1.xpose.msra.mxu0 0.0
    %476 = vmatprep.subr.mxu0 0.0
    %477 = vmatpush1.xpose.msra.mxu0 0.0
    %478 = vmatprep.subr.mxu0 0.0
    %479 = vmatpush1.xpose.msra.mxu0 0.0
    %480 = vmatprep.subr.mxu0 0.0
    %481 = vmatpush1.xpose.msra.mxu0 0.0
    %482 = vmatprep.subr.mxu0 0.0
    %483 = vmatpush1.xpose.msra.mxu0 0.0
    %484 = vmatprep.subr.mxu0 0.0
    %485 = vmatpush1.xpose.msra.mxu0 0.0
    %486 = vmatprep.subr.mxu0 0.0
    %487 = vmatpush1.xpose.msra.mxu0 0.0
    %488 = vmatprep.subr.mxu0 0.0
    %489 = vmatpush1.xpose.msra.mxu0 0.0
    %490 = vmatprep.subr.mxu0 0.0
    %491 = vmatpush1.xpose.msra.mxu0 0.0
    %492 = vmatprep.subr.mxu0 0.0
    %493 = vmatpush1.xpose.msra.mxu0 0.0
    %494 = vmatprep.subr.mxu0 0.0
    %495 = vmatpush1.xpose.msra.mxu0 0.0
    %496 = vmatprep.subr.mxu0 0.0
    %497 = vmatpush1.xpose.msra.mxu0 0.0
    %498 = vmatprep.subr.mxu0 0.0
    %499 = vmatpush1.xpose.msra.mxu0 0.0
    %500 = vmatprep.subr.mxu0 0.0
    %501 = vmatpush1.xpose.msra.mxu0 0.0
    %502 = vmatprep.subr.mxu0 0.0
    %503 = vmatpush1.xpose.msra.mxu0 0.0
    %504 = vmatprep.subr.mxu0 0.0
    %505 = vmatpush1.xpose.msra.mxu0 0.0
    %506 = vmatprep.mubr.f32.mxu0 0.0
    %507 = vmatmul.mubr.f32.gmra.mrb[0].mxu0 %v437
    %v508 = vpop.f32.mrb[0].mxu0
    %v509 = vadd.f32 %v422, %v508
    %v510 = vpop.f32.mrb[0].mxu0
    %511 = vdwg.mxu0
    %v512 = vsel %vm435, %v509, -inf
    %513 = vmax.xlane.f32.xlu0 %v512
    %v514 = vpop.xlane.xlu0 %513
    %v515 = vsub.f32 %v509, %v514
    %v516 = vmul.f32 %v515, 1.442695
    %v517 = vpow.pop %v516
    %v518 = vsel %vm435, %v517, 0.0
    %519 = vadd.xlane.f32.xlu0 %v518
    %v520 = vpop.xlane.xlu0 %519
    %v521 = vrcp.pop %v520
    %v522 = vmul.f32 %v517, %v521
    %v524 = vsel %vm435, %v522, 0
    %526 = vmatprep.subr.mxu0 0.0
    %527 = vmatpush1.msra.mxu0 %v414
    %528 = vmatprep.subr.mxu0 0.0
    %529 = vmatpush1.msra.mxu0 0.0
    %530 = vmatprep.subr.mxu0 0.0
    %531 = vmatpush1.msra.mxu0 0.0
    %532 = vmatprep.subr.mxu0 0.0
    %533 = vmatpush1.msra.mxu0 0.0
    %534 = vmatprep.subr.mxu0 0.0
    %535 = vmatpush1.msra.mxu0 0.0
    %536 = vmatprep.subr.mxu0 0.0
    %537 = vmatpush1.msra.mxu0 0.0
    %538 = vmatprep.subr.mxu0 0.0
    %539 = vmatpush1.msra.mxu0 0.0
    %540 = vmatprep.subr.mxu0 0.0
    %541 = vmatpush1.msra.mxu0 0.0
    %542 = vmatprep.subr.mxu0 0.0
    %543 = vmatpush1.msra.mxu0 0.0
    %544 = vmatprep.subr.mxu0 0.0
    %545 = vmatpush1.msra.mxu0 0.0
    %546 = vmatprep.subr.mxu0 0.0
    %547 = vmatpush1.msra.mxu0 0.0
    %548 = vmatprep.subr.mxu0 0.0
    %549 = vmatpush1.msra.mxu0 0.0
    %550 = vmatprep.subr.mxu0 0.0
    %551 = vmatpush1.msra.mxu0 0.0
    %552 = vmatprep.subr.mxu0 0.0
    %553 = vmatpush1.msra.mxu0 0.0
    %554 = vmatprep.subr.mxu0 0.0
    %555 = vmatpush1.msra.mxu0 0.0
    %556 = vmatprep.subr.mxu0 0.0
    %557 = vmatpush1.msra.mxu0 0.0
    %558 = vmatprep.subr.mxu0 0.0
    %559 = vmatpush1.msra.mxu0 0.0
    %560 = vmatprep.subr.mxu0 0.0
    %561 = vmatpush1.msra.mxu0 0.0
    %562 = vmatprep.subr.mxu0 0.0
    %563 = vmatpush1.msra.mxu0 0.0
    %564 = vmatprep.subr.mxu0 0.0
    %565 = vmatpush1.msra.mxu0 0.0
    %566 = vmatprep.subr.mxu0 0.0
    %567 = vmatpush1.msra.mxu0 0.0
    %568 = vmatprep.subr.mxu0 0.0
    %569 = vmatpush1.msra.mxu0 0.0
    %570 = vmatprep.subr.mxu0 0.0
    %571 = vmatpush1.msra.mxu0 0.0
    %572 = vmatprep.subr.mxu0 0.0
    %573 = vmatpush1.msra.mxu0 0.0
    %574 = vmatprep.subr.mxu0 0.0
    %575 = vmatpush1.msra.mxu0 0.0
    %576 = vmatprep.subr.mxu0 0.0
    %577 = vmatpush1.msra.mxu0 0.0
    %578 = vmatprep.subr.mxu0 0.0
    %579 = vmatpush1.msra.mxu0 0.0
    %580 = vmatprep.subr.mxu0 0.0
    %581 = vmatpush1.msra.mxu0 0.0
    %582 = vmatprep.subr.mxu0 0.0
    %583 = vmatpush1.msra.mxu0 0.0
    %584 = vmatprep.subr.mxu0 0.0
    %585 = vmatpush1.msra.mxu0 0.0
    %586 = vmatprep.subr.mxu0 0.0
    %587 = vmatpush1.msra.mxu0 0.0
    %588 = vmatprep.subr.mxu0 0.0
    %589 = vmatpush1.msra.mxu0 0.0
    %590 = vmatprep.mubr.f32.mxu0 0.0
    %591 = vmatmul.mubr.f32.gmra.mrb[0].mxu0 %v524
    %v592 = vpop.f32.mrb[0].mxu0
    %v593 = vadd.f32 0.0, %v592
    %v594 = vpop.f32.mrb[0].mxu0
    %595 = vdwg.mxu0
    %596 = vrot.lane.b32.xlu0 %v232, 120
    %v597 = vpop.permute.xlu0 %596
    %598 = vrot.lane.b32.xlu0 %v320, 120
    %v599 = vpop.permute.xlu0 %598
    %v600 = vsel %vm435, %v597, 0
    %v602 = vsel %vm435, %v599, 0
    %604 = vmatprep.subr.mxu0 0.0
    %605 = vmatpush1.xpose.msra.mxu0 %v602
    %606 = vmatprep.subr.mxu0 0.0
    %607 = vmatpush1.xpose.msra.mxu0 0.0
    %608 = vmatprep.subr.mxu0 0.0
    %609 = vmatpush1.xpose.msra.mxu0 0.0
    %610 = vmatprep.subr.mxu0 0.0
    %611 = vmatpush1.xpose.msra.mxu0 0.0
    %612 = vmatprep.subr.mxu0 0.0
    %613 = vmatpush1.xpose.msra.mxu0 0.0
    %614 = vmatprep.subr.mxu0 0.0
    %615 = vmatpush1.xpose.msra.mxu0 0.0
    %616 = vmatprep.subr.mxu0 0.0
    %617 = vmatpush1.xpose.msra.mxu0 0.0
    %618 = vmatprep.subr.mxu0 0.0
    %619 = vmatpush1.xpose.msra.mxu0 0.0
    %620 = vmatprep.subr.mxu0 0.0
    %621 = vmatpush1.xpose.msra.mxu0 0.0
    %622 = vmatprep.subr.mxu0 0.0
    %623 = vmatpush1.xpose.msra.mxu0 0.0
    %624 = vmatprep.subr.mxu0 0.0
    %625 = vmatpush1.xpose.msra.mxu0 0.0
    %626 = vmatprep.subr.mxu0 0.0
    %627 = vmatpush1.xpose.msra.mxu0 0.0
    %628 = vmatprep.subr.mxu0 0.0
    %629 = vmatpush1.xpose.msra.mxu0 0.0
    %630 = vmatprep.subr.mxu0 0.0
    %631 = vmatpush1.xpose.msra.mxu0 0.0
    %632 = vmatprep.subr.mxu0 0.0
    %633 = vmatpush1.xpose.msra.mxu0 0.0
    %634 = vmatprep.subr.mxu0 0.0
    %635 = vmatpush1.xpose.msra.mxu0 0.0
    %636 = vmatprep.subr.mxu0 0.0
    %637 = vmatpush1.xpose.msra.mxu0 0.0
    %638 = vmatprep.subr.mxu0 0.0
    %639 = vmatpush1.xpose.msra.mxu0 0.0
    %640 = vmatprep.subr.mxu0 0.0
    %641 = vmatpush1.xpose.msra.mxu0 0.0
    %642 = vmatprep.subr.mxu0 0.0
    %643 = vmatpush1.xpose.msra.mxu0 0.0
    %644 = vmatprep.subr.mxu0 0.0
    %645 = vmatpush1.xpose.msra.mxu0 0.0
    %646 = vmatprep.subr.mxu0 0.0
    %647 = vmatpush1.xpose.msra.mxu0 0.0
    %648 = vmatprep.subr.mxu0 0.0
    %649 = vmatpush1.xpose.msra.mxu0 0.0
    %650 = vmatprep.subr.mxu0 0.0
    %651 = vmatpush1.xpose.msra.mxu0 0.0
    %652 = vmatprep.subr.mxu0 0.0
    %653 = vmatpush1.xpose.msra.mxu0 0.0
    %654 = vmatprep.subr.mxu0 0.0
    %655 = vmatpush1.xpose.msra.mxu0 0.0
    %656 = vmatprep.subr.mxu0 0.0
    %657 = vmatpush1.xpose.msra.mxu0 0.0
    %658 = vmatprep.subr.mxu0 0.0
    %659 = vmatpush1.xpose.msra.mxu0 0.0
    %660 = vmatprep.subr.mxu0 0.0
    %661 = vmatpush1.xpose.msra.mxu0 0.0
    %662 = vmatprep.subr.mxu0 0.0
    %663 = vmatpush1.xpose.msra.mxu0 0.0
    %664 = vmatprep.subr.mxu0 0.0
    %665 = vmatpush1.xpose.msra.mxu0 0.0
    %666 = vmatprep.subr.mxu0 0.0
    %667 = vmatpush1.xpose.msra.mxu0 0.0
    %668 = vmatprep.mubr.f32.mxu0 0.0
    %669 = vmatmul.mubr.f32.gmra.mrb[0].mxu0 %v600
    %v670 = vpop.f32.mrb[0].mxu0
    %v671 = vadd.f32 %v423, %v670
    %v672 = vpop.f32.mrb[0].mxu0
    %673 = vdwg.mxu0
    %v674 = vsel %vm435, %v671, -inf
    %675 = vmax.xlane.f32.xlu0 %v674
    %v676 = vpop.xlane.xlu0 %675
    %v677 = vsub.f32 %v671, %v676
    %v678 = vmul.f32 %v677, 1.442695
    %v679 = vpow.pop %v678
    %v680 = vsel %vm435, %v679, 0.0
    %681 = vadd.xlane.f32.xlu0 %v680
    %v682 = vpop.xlane.xlu0 %681
    %v683 = vrcp.pop %v682
    %v684 = vmul.f32 %v679, %v683
    %686 = vrot.lane.b32.xlu0 %v414, 120
    %v687 = vpop.permute.xlu0 %686
    %v690 = vsel %vm435, %v684, 0
    %692 = vmatprep.subr.mxu0 0.0
    %693 = vmatpush1.msra.mxu0 %v687
    %694 = vmatprep.subr.mxu0 0.0
    %695 = vmatpush1.msra.mxu0 0.0
    %696 = vmatprep.subr.mxu0 0.0
    %697 = vmatpush1.msra.mxu0 0.0
    %698 = vmatprep.subr.mxu0 0.0
    %699 = vmatpush1.msra.mxu0 0.0
    %700 = vmatprep.subr.mxu0 0.0
    %701 = vmatpush1.msra.mxu0 0.0
    %702 = vmatprep.subr.mxu0 0.0
    %703 = vmatpush1.msra.mxu0 0.0
    %704 = vmatprep.subr.mxu0 0.0
    %705 = vmatpush1.msra.mxu0 0.0
    %706 = vmatprep.subr.mxu0 0.0
    %707 = vmatpush1.msra.mxu0 0.0
    %708 = vmatprep.subr.mxu0 0.0
    %709 = vmatpush1.msra.mxu0 0.0
    %710 = vmatprep.subr.mxu0 0.0
    %711 = vmatpush1.msra.mxu0 0.0
    %712 = vmatprep.subr.mxu0 0.0
    %713 = vmatpush1.msra.mxu0 0.0
    %714 = vmatprep.subr.mxu0 0.0
    %715 = vmatpush1.msra.mxu0 0.0
    %716 = vmatprep.subr.mxu0 0.0
    %717 = vmatpush1.msra.mxu0 0.0
    %718 = vmatprep.subr.mxu0 0.0
    %719 = vmatpush1.msra.mxu0 0.0
    %720 = vmatprep.subr.mxu0 0.0
    %721 = vmatpush1.msra.mxu0 0.0
    %722 = vmatprep.subr.mxu0 0.0
    %723 = vmatpush1.msra.mxu0 0.0
    %724 = vmatprep.subr.mxu0 0.0
    %725 = vmatpush1.msra.mxu0 0.0
    %726 = vmatprep.subr.mxu0 0.0
    %727 = vmatpush1.msra.mxu0 0.0
    %728 = vmatprep.subr.mxu0 0.0
    %729 = vmatpush1.msra.mxu0 0.0
    %730 = vmatprep.subr.mxu0 0.0
    %731 = vmatpush1.msra.mxu0 0.0
    %732 = vmatprep.subr.mxu0 0.0
    %733 = vmatpush1.msra.mxu0 0.0
    %734 = vmatprep.subr.mxu0 0.0
    %735 = vmatpush1.msra.mxu0 0.0
    %736 = vmatprep.subr.mxu0 0.0
    %737 = vmatpush1.msra.mxu0 0.0
    %738 = vmatprep.subr.mxu0 0.0
    %739 = vmatpush1.msra.mxu0 0.0
    %740 = vmatprep.subr.mxu0 0.0
    %741 = vmatpush1.msra.mxu0 0.0
    %742 = vmatprep.subr.mxu0 0.0
    %743 = vmatpush1.msra.mxu0 0.0
    %744 = vmatprep.subr.mxu0 0.0
    %745 = vmatpush1.msra.mxu0 0.0
    %746 = vmatprep.subr.mxu0 0.0
    %747 = vmatpush1.msra.mxu0 0.0
    %748 = vmatprep.subr.mxu0 0.0
    %749 = vmatpush1.msra.mxu0 0.0
    %750 = vmatprep.subr.mxu0 0.0
    %751 = vmatpush1.msra.mxu0 0.0
    %752 = vmatprep.subr.mxu0 0.0
    %753 = vmatpush1.msra.mxu0 0.0
    %754 = vmatprep.subr.mxu0 0.0
    %755 = vmatpush1.msra.mxu0 0.0
    %756 = vmatprep.mubr.f32.mxu0 0.0
    %757 = vmatmul.mubr.f32.gmra.mrb[0].mxu0 %v690
    %v758 = vpop.f32.mrb[0].mxu0
    %v759 = vadd.f32 0.0, %v758
    %v760 = vpop.f32.mrb[0].mxu0
    %761 = vdwg.mxu0
    %v763 = vsel %vm435, %v759, 0
    %765 = vmatprep.subr.mxu0 0.0
    %766 = vmatpush1.msra.mxu0 %v431
    %767 = vmatprep.subr.mxu0 0.0
    %768 = vmatpush1.msra.mxu0 0.0
    %769 = vmatprep.subr.mxu0 0.0
    %770 = vmatpush1.msra.mxu0 0.0
    %771 = vmatprep.subr.mxu0 0.0
    %772 = vmatpush1.msra.mxu0 0.0
    %773 = vmatprep.subr.mxu0 0.0
    %774 = vmatpush1.msra.mxu0 0.0
    %775 = vmatprep.subr.mxu0 0.0
    %776 = vmatpush1.msra.mxu0 0.0
    %777 = vmatprep.subr.mxu0 0.0
    %778 = vmatpush1.msra.mxu0 0.0
    %779 = vmatprep.subr.mxu0 0.0
    %780 = vmatpush1.msra.mxu0 0.0
    %781 = vmatprep.subr.mxu0 0.0
    %782 = vmatpush1.msra.mxu0 0.0
    %783 = vmatprep.subr.mxu0 0.0
    %784 = vmatpush1.msra.mxu0 0.0
    %785 = vmatprep.subr.mxu0 0.0
    %786 = vmatpush1.msra.mxu0 0.0
    %787 = vmatprep.subr.mxu0 0.0
    %788 = vmatpush1.msra.mxu0 0.0
    %789 = vmatprep.subr.mxu0 0.0
    %790 = vmatpush1.msra.mxu0 0.0
    %791 = vmatprep.subr.mxu0 0.0
    %792 = vmatpush1.msra.mxu0 0.0
    %793 = vmatprep.subr.mxu0 0.0
    %794 = vmatpush1.msra.mxu0 0.0
    %795 = vmatprep.subr.mxu0 0.0
    %796 = vmatpush1.msra.mxu0 0.0
    %797 = vmatprep.subr.mxu0 0.0
    %798 = vmatpush1.msra.mxu0 0.0
    %799 = vmatprep.subr.mxu0 0.0
    %800 = vmatpush1.msra.mxu0 0.0
    %801 = vmatprep.subr.mxu0 0.0
    %802 = vmatpush1.msra.mxu0 0.0
    %803 = vmatprep.subr.mxu0 0.0
    %804 = vmatpush1.msra.mxu0 0.0
    %805 = vmatprep.subr.mxu0 0.0
    %806 = vmatpush1.msra.mxu0 0.0
    %807 = vmatprep.subr.mxu0 0.0
    %808 = vmatpush1.msra.mxu0 0.0
    %809 = vmatprep.subr.mxu0 0.0
    %810 = vmatpush1.msra.mxu0 0.0
    %811 = vmatprep.subr.mxu0 0.0
    %812 = vmatpush1.msra.mxu0 0.0
    %813 = vmatprep.subr.mxu0 0.0
    %814 = vmatpush1.msra.mxu0 0.0
    %815 = vmatprep.subr.mxu0 0.0
    %816 = vmatpush1.msra.mxu0 0.0
    %817 = vmatprep.subr.mxu0 0.0
    %818 = vmatpush1.msra.mxu0 0.0
    %819 = vmatprep.subr.mxu0 0.0
    %820 = vmatpush1.msra.mxu0 0.0
    %821 = vmatprep.subr.mxu0 0.0
    %822 = vmatpush1.msra.mxu0 0.0
    %823 = vmatprep.subr.mxu0 0.0
    %824 = vmatpush1.msra.mxu0 0.0
    %825 = vmatprep.subr.mxu0 0.0
    %826 = vmatpush1.msra.mxu0 0.0
    %827 = vmatprep.subr.mxu0 0.0
    %828 = vmatpush1.msra.mxu0 0.0
    %829 = vmatprep.mubr.f32.mxu0 0.0
    %830 = vmatmul.mubr.f32.gmra.mrb[0].mxu0 %v763
    %v831 = vpop.f32.mrb[0].mxu0
    %v832 = vadd.f32 0.0, %v831
    %v833 = vpop.f32.mrb[0].mxu0
    %834 = vdwg.mxu0
    %v836 = vsel %vm435, %v593, 0
    %838 = vmatprep.subr.mxu0 0.0
    %839 = vmatpush1.msra.mxu0 %v430
    %840 = vmatprep.subr.mxu0 0.0
    %841 = vmatpush1.msra.mxu0 0.0
    %842 = vmatprep.subr.mxu0 0.0
    %843 = vmatpush1.msra.mxu0 0.0
    %844 = vmatprep.subr.mxu0 0.0
    %845 = vmatpush1.msra.mxu0 0.0
    %846 = vmatprep.subr.mxu0 0.0
    %847 = vmatpush1.msra.mxu0 0.0
    %848 = vmatprep.subr.mxu0 0.0
    %849 = vmatpush1.msra.mxu0 0.0
    %850 = vmatprep.subr.mxu0 0.0
    %851 = vmatpush1.msra.mxu0 0.0
    %852 = vmatprep.subr.mxu0 0.0
    %853 = vmatpush1.msra.mxu0 0.0
    %854 = vmatprep.subr.mxu0 0.0
    %855 = vmatpush1.msra.mxu0 0.0
    %856 = vmatprep.subr.mxu0 0.0
    %857 = vmatpush1.msra.mxu0 0.0
    %858 = vmatprep.subr.mxu0 0.0
    %859 = vmatpush1.msra.mxu0 0.0
    %860 = vmatprep.subr.mxu0 0.0
    %861 = vmatpush1.msra.mxu0 0.0
    %862 = vmatprep.subr.mxu0 0.0
    %863 = vmatpush1.msra.mxu0 0.0
    %864 = vmatprep.subr.mxu0 0.0
    %865 = vmatpush1.msra.mxu0 0.0
    %866 = vmatprep.subr.mxu0 0.0
    %867 = vmatpush1.msra.mxu0 0.0
    %868 = vmatprep.subr.mxu0 0.0
    %869 = vmatpush1.msra.mxu0 0.0
    %870 = vmatprep.subr.mxu0 0.0
    %871 = vmatpush1.msra.mxu0 0.0
    %872 = vmatprep.subr.mxu0 0.0
    %873 = vmatpush1.msra.mxu0 0.0
    %874 = vmatprep.subr.mxu0 0.0
    %875 = vmatpush1.msra.mxu0 0.0
    %876 = vmatprep.subr.mxu0 0.0
    %877 = vmatpush1.msra.mxu0 0.0
    %878 = vmatprep.subr.mxu0 0.0
    %879 = vmatpush1.msra.mxu0 0.0
    %880 = vmatprep.subr.mxu0 0.0
    %881 = vmatpush1.msra.mxu0 0.0
    %882 = vmatprep.subr.mxu0 0.0
    %883 = vmatpush1.msra.mxu0 0.0
    %884 = vmatprep.subr.mxu0 0.0
    %885 = vmatpush1.msra.mxu0 0.0
    %886 = vmatprep.subr.mxu0 0.0
    %887 = vmatpush1.msra.mxu0 0.0
    %888 = vmatprep.subr.mxu0 0.0
    %889 = vmatpush1.msra.mxu0 0.0
    %890 = vmatprep.subr.mxu0 0.0
    %891 = vmatpush1.msra.mxu0 0.0
    %892 = vmatprep.subr.mxu0 0.0
    %893 = vmatpush1.msra.mxu0 0.0
    %894 = vmatprep.subr.mxu0 0.0
    %895 = vmatpush1.msra.mxu0 0.0
    %896 = vmatprep.subr.mxu0 0.0
    %897 = vmatpush1.msra.mxu0 0.0
    %898 = vmatprep.subr.mxu0 0.0
    %899 = vmatpush1.msra.mxu0 0.0
    %900 = vmatprep.subr.mxu0 0.0
    %901 = vmatpush1.msra.mxu0 0.0
    %902 = vmatprep.mubr.f32.mxu0 0.0
    %903 = vmatmul.mubr.f32.gmra.mrb[0].mxu0 %v836
    %v904 = vpop.f32.mrb[0].mxu0
    %v905 = vadd.f32 %v832, %v904
    %v906 = vpop.f32.mrb[0].mxu0
    %907 = vdwg.mxu0
    %908 = vrot.lane.b32.xlu0 %v232, 112
    %v909 = vpop.permute.xlu0 %908
    %910 = vrot.lane.b32.xlu0 %v320, 112
    %v911 = vpop.permute.xlu0 %910
    %v912 = vsel %vm435, %v909, 0
    %v914 = vsel %vm435, %v911, 0
    %916 = vmatprep.subr.mxu0 0.0
    %917 = vmatpush1.xpose.msra.mxu0 %v914
    %918 = vmatprep.subr.mxu0 0.0
    %919 = vmatpush1.xpose.msra.mxu0 0.0
    %920 = vmatprep.subr.mxu0 0.0
    %921 = vmatpush1.xpose.msra.mxu0 0.0
    %922 = vmatprep.subr.mxu0 0.0
    %923 = vmatpush1.xpose.msra.mxu0 0.0
    %924 = vmatprep.subr.mxu0 0.0
    %925 = vmatpush1.xpose.msra.mxu0 0.0
    %926 = vmatprep.subr.mxu0 0.0
    %927 = vmatpush1.xpose.msra.mxu0 0.0
    %928 = vmatprep.subr.mxu0 0.0
    %929 = vmatpush1.xpose.msra.mxu0 0.0
    %930 = vmatprep.subr.mxu0 0.0
    %931 = vmatpush1.xpose.msra.mxu0 0.0
    %932 = vmatprep.subr.mxu0 0.0
    %933 = vmatpush1.xpose.msra.mxu0 0.0
    %934 = vmatprep.subr.mxu0 0.0
    %935 = vmatpush1.xpose.msra.mxu0 0.0
    %936 = vmatprep.subr.mxu0 0.0
    %937 = vmatpush1.xpose.msra.mxu0 0.0
    %938 = vmatprep.subr.mxu0 0.0
    %939 = vmatpush1.xpose.msra.mxu0 0.0
    %940 = vmatprep.subr.mxu0 0.0
    %941 = vmatpush1.xpose.msra.mxu0 0.0
    %942 = vmatprep.subr.mxu0 0.0
    %943 = vmatpush1.xpose.msra.mxu0 0.0
    %944 = vmatprep.subr.mxu0 0.0
    %945 = vmatpush1.xpose.msra.mxu0 0.0
    %946 = vmatprep.subr.mxu0 0.0
    %947 = vmatpush1.xpose.msra.mxu0 0.0
    %948 = vmatprep.subr.mxu0 0.0
    %949 = vmatpush1.xpose.msra.mxu0 0.0
    %950 = vmatprep.subr.mxu0 0.0
    %951 = vmatpush1.xpose.msra.mxu0 0.0
    %952 = vmatprep.subr.mxu0 0.0
    %953 = vmatpush1.xpose.msra.mxu0 0.0
    %954 = vmatprep.subr.mxu0 0.0
    %955 = vmatpush1.xpose.msra.mxu0 0.0
    %956 = vmatprep.subr.mxu0 0.0
    %957 = vmatpush1.xpose.msra.mxu0 0.0
    %958 = vmatprep.subr.mxu0 0.0
    %959 = vmatpush1.xpose.msra.mxu0 0.0
    %960 = vmatprep.subr.mxu0 0.0
    %961 = vmatpush1.xpose.msra.mxu0 0.0
    %962 = vmatprep.subr.mxu0 0.0
    %963 = vmatpush1.xpose.msra.mxu0 0.0
    %964 = vmatprep.subr.mxu0 0.0
    %965 = vmatpush1.xpose.msra.mxu0 0.0
    %966 = vmatprep.subr.mxu0 0.0
    %967 = vmatpush1.xpose.msra.mxu0 0.0
    %968 = vmatprep.subr.mxu0 0.0
    %969 = vmatpush1.xpose.msra.mxu0 0.0
    %970 = vmatprep.subr.mxu0 0.0
    %971 = vmatpush1.xpose.msra.mxu0 0.0
    %972 = vmatprep.subr.mxu0 0.0
    %973 = vmatpush1.xpose.msra.mxu0 0.0
    %974 = vmatprep.subr.mxu0 0.0
    %975 = vmatpush1.xpose.msra.mxu0 0.0
    %976 = vmatprep.subr.mxu0 0.0
    %977 = vmatpush1.xpose.msra.mxu0 0.0
    %978 = vmatprep.subr.mxu0 0.0
    %979 = vmatpush1.xpose.msra.mxu0 0.0
    %980 = vmatprep.mubr.f32.mxu0 0.0
    %981 = vmatmul.mubr.f32.gmra.mrb[0].mxu0 %v912
    %v982 = vpop.f32.mrb[0].mxu0
    %v983 = vadd.f32 %v424, %v982
    %v984 = vpop.f32.mrb[0].mxu0
    %985 = vdwg.mxu0
    %v986 = vsel %vm435, %v983, -inf
    %987 = vmax.xlane.f32.xlu0 %v986
    %v988 = vpop.xlane.xlu0 %987
    %v989 = vsub.f32 %v983, %v988
    %v990 = vmul.f32 %v989, 1.442695
    %v991 = vpow.pop %v990
    %v992 = vsel %vm435, %v991, 0.0
    %993 = vadd.xlane.f32.xlu0 %v992
    %v994 = vpop.xlane.xlu0 %993
    %v995 = vrcp.pop %v994
    %v996 = vmul.f32 %v991, %v995
    %997 = vrot.lane.b32.xlu0 %v414, 112
    %v998 = vpop.permute.xlu0 %997
    %v1001 = vsel %vm435, %v996, 0
    %1003 = vmatprep.subr.mxu0 0.0
    %1004 = vmatpush1.msra.mxu0 %v998
    %1005 = vmatprep.subr.mxu0 0.0
    %1006 = vmatpush1.msra.mxu0 0.0
    %1007 = vmatprep.subr.mxu0 0.0
    %1008 = vmatpush1.msra.mxu0 0.0
    %1009 = vmatprep.subr.mxu0 0.0
    %1010 = vmatpush1.msra.mxu0 0.0
    %1011 = vmatprep.subr.mxu0 0.0
    %1012 = vmatpush1.msra.mxu0 0.0
    %1013 = vmatprep.subr.mxu0 0.0
    %1014 = vmatpush1.msra.mxu0 0.0
    %1015 = vmatprep.subr.mxu0 0.0
    %1016 = vmatpush1.msra.mxu0 0.0
    %1017 = vmatprep.subr.mxu0 0.0
    %1018 = vmatpush1.msra.mxu0 0.0
    %1019 = vmatprep.subr.mxu0 0.0
    %1020 = vmatpush1.msra.mxu0 0.0
    %1021 = vmatprep.subr.mxu0 0.0
    %1022 = vmatpush1.msra.mxu0 0.0
    %1023 = vmatprep.subr.mxu0 0.0
    %1024 = vmatpush1.msra.mxu0 0.0
    %1025 = vmatprep.subr.mxu0 0.0
    %1026 = vmatpush1.msra.mxu0 0.0
    %1027 = vmatprep.subr.mxu0 0.0
    %1028 = vmatpush1.msra.mxu0 0.0
    %1029 = vmatprep.subr.mxu0 0.0
    %1030 = vmatpush1.msra.mxu0 0.0
    %1031 = vmatprep.subr.mxu0 0.0
    %1032 = vmatpush1.msra.mxu0 0.0
    %1033 = vmatprep.subr.mxu0 0.0
    %1034 = vmatpush1.msra.mxu0 0.0
    %1035 = vmatprep.subr.mxu0 0.0
    %1036 = vmatpush1.msra.mxu0 0.0
    %1037 = vmatprep.subr.mxu0 0.0
    %1038 = vmatpush1.msra.mxu0 0.0
    %1039 = vmatprep.subr.mxu0 0.0
    %1040 = vmatpush1.msra.mxu0 0.0
    %1041 = vmatprep.subr.mxu0 0.0
    %1042 = vmatpush1.msra.mxu0 0.0
    %1043 = vmatprep.subr.mxu0 0.0
    %1044 = vmatpush1.msra.mxu0 0.0
    %1045 = vmatprep.subr.mxu0 0.0
    %1046 = vmatpush1.msra.mxu0 0.0
    %1047 = vmatprep.subr.mxu0 0.0
    %1048 = vmatpush1.msra.mxu0 0.0
    %1049 = vmatprep.subr.mxu0 0.0
    %1050 = vmatpush1.msra.mxu0 0.0
    %1051 = vmatprep.subr.mxu0 0.0
    %1052 = vmatpush1.msra.mxu0 0.0
    %1053 = vmatprep.subr.mxu0 0.0
    %1054 = vmatpush1.msra.mxu0 0.0
    %1055 = vmatprep.subr.mxu0 0.0
    %1056 = vmatpush1.msra.mxu0 0.0
    %1057 = vmatprep.subr.mxu0 0.0
    %1058 = vmatpush1.msra.mxu0 0.0
    %1059 = vmatprep.subr.mxu0 0.0
    %1060 = vmatpush1.msra.mxu0 0.0
    %1061 = vmatprep.subr.mxu0 0.0
    %1062 = vmatpush1.msra.mxu0 0.0
    %1063 = vmatprep.subr.mxu0 0.0
    %1064 = vmatpush1.msra.mxu0 0.0
    %1065 = vmatprep.subr.mxu0 0.0
    %1066 = vmatpush1.msra.mxu0 0.0
    %1067 = vmatprep.mubr.f32.mxu0 0.0
    %1068 = vmatmul.mubr.f32.gmra.mrb[0].mxu0 %v1001
    %v1069 = vpop.f32.mrb[0].mxu0
    %v1070 = vadd.f32 0.0, %v1069
    %v1071 = vpop.f32.mrb[0].mxu0
    %1072 = vdwg.mxu0
    %v1074 = vsel %vm435, %v1070, 0
    %1076 = vmatprep.subr.mxu0 0.0
    %1077 = vmatpush1.msra.mxu0 %v432
    %1078 = vmatprep.subr.mxu0 0.0
    %1079 = vmatpush1.msra.mxu0 0.0
    %1080 = vmatprep.subr.mxu0 0.0
    %1081 = vmatpush1.msra.mxu0 0.0
    %1082 = vmatprep.subr.mxu0 0.0
    %1083 = vmatpush1.msra.mxu0 0.0
    %1084 = vmatprep.subr.mxu0 0.0
    %1085 = vmatpush1.msra.mxu0 0.0
    %1086 = vmatprep.subr.mxu0 0.0
    %1087 = vmatpush1.msra.mxu0 0.0
    %1088 = vmatprep.subr.mxu0 0.0
    %1089 = vmatpush1.msra.mxu0 0.0
    %1090 = vmatprep.subr.mxu0 0.0
    %1091 = vmatpush1.msra.mxu0 0.0
    %1092 = vmatprep.subr.mxu0 0.0
    %1093 = vmatpush1.msra.mxu0 0.0
    %1094 = vmatprep.subr.mxu0 0.0
    %1095 = vmatpush1.msra.mxu0 0.0
    %1096 = vmatprep.subr.mxu0 0.0
    %1097 = vmatpush1.msra.mxu0 0.0
    %1098 = vmatprep.subr.mxu0 0.0
    %1099 = vmatpush1.msra.mxu0 0.0
    %1100 = vmatprep.subr.mxu0 0.0
    %1101 = vmatpush1.msra.mxu0 0.0
    %1102 = vmatprep.subr.mxu0 0.0
    %1103 = vmatpush1.msra.mxu0 0.0
    %1104 = vmatprep.subr.mxu0 0.0
    %1105 = vmatpush1.msra.mxu0 0.0
    %1106 = vmatprep.subr.mxu0 0.0
    %1107 = vmatpush1.msra.mxu0 0.0
    %1108 = vmatprep.subr.mxu0 0.0
    %1109 = vmatpush1.msra.mxu0 0.0
    %1110 = vmatprep.subr.mxu0 0.0
    %1111 = vmatpush1.msra.mxu0 0.0
    %1112 = vmatprep.subr.mxu0 0.0
    %1113 = vmatpush1.msra.mxu0 0.0
    %1114 = vmatprep.subr.mxu0 0.0
    %1115 = vmatpush1.msra.mxu0 0.0
    %1116 = vmatprep.subr.mxu0 0.0
    %1117 = vmatpush1.msra.mxu0 0.0
    %1118 = vmatprep.subr.mxu0 0.0
    %1119 = vmatpush1.msra.mxu0 0.0
    %1120 = vmatprep.subr.mxu0 0.0
    %1121 = vmatpush1.msra.mxu0 0.0
    %1122 = vmatprep.subr.mxu0 0.0
    %1123 = vmatpush1.msra.mxu0 0.0
    %1124 = vmatprep.subr.mxu0 0.0
    %1125 = vmatpush1.msra.mxu0 0.0
    %1126 = vmatprep.subr.mxu0 0.0
    %1127 = vmatpush1.msra.mxu0 0.0
    %1128 = vmatprep.subr.mxu0 0.0
    %1129 = vmatpush1.msra.mxu0 0.0
    %1130 = vmatprep.subr.mxu0 0.0
    %1131 = vmatpush1.msra.mxu0 0.0
    %1132 = vmatprep.subr.mxu0 0.0
    %1133 = vmatpush1.msra.mxu0 0.0
    %1134 = vmatprep.subr.mxu0 0.0
    %1135 = vmatpush1.msra.mxu0 0.0
    %1136 = vmatprep.subr.mxu0 0.0
    %1137 = vmatpush1.msra.mxu0 0.0
    %1138 = vmatprep.subr.mxu0 0.0
    %1139 = vmatpush1.msra.mxu0 0.0
    %1140 = vmatprep.mubr.f32.mxu0 0.0
    %1141 = vmatmul.mubr.f32.gmra.mrb[0].mxu0 %v1074
    %v1142 = vpop.f32.mrb[0].mxu0
    %v1143 = vadd.f32 0.0, %v1142
    %v1144 = vpop.f32.mrb[0].mxu0
    %1145 = vdwg.mxu0
    %v1146 = vadd.f32 %v905, %v1143
    %1147 = vrot.lane.b32.xlu0 %v232, 104
    %v1148 = vpop.permute.xlu0 %1147
    %1149 = vrot.lane.b32.xlu0 %v320, 104
    %v1150 = vpop.permute.xlu0 %1149
    %v1151 = vsel %vm435, %v1148, 0
    %v1153 = vsel %vm435, %v1150, 0
    %1155 = vmatprep.subr.mxu0 0.0
    %1156 = vmatpush1.xpose.msra.mxu0 %v1153
    %1157 = vmatprep.subr.mxu0 0.0
    %1158 = vmatpush1.xpose.msra.mxu0 0.0
    %1159 = vmatprep.subr.mxu0 0.0
    %1160 = vmatpush1.xpose.msra.mxu0 0.0
    %1161 = vmatprep.subr.mxu0 0.0
    %1162 = vmatpush1.xpose.msra.mxu0 0.0
    %1163 = vmatprep.subr.mxu0 0.0
    %1164 = vmatpush1.xpose.msra.mxu0 0.0
    %1165 = vmatprep.subr.mxu0 0.0
    %1166 = vmatpush1.xpose.msra.mxu0 0.0
    %1167 = vmatprep.subr.mxu0 0.0
    %1168 = vmatpush1.xpose.msra.mxu0 0.0
    %1169 = vmatprep.subr.mxu0 0.0
    %1170 = vmatpush1.xpose.msra.mxu0 0.0
    %1171 = vmatprep.subr.mxu0 0.0
    %1172 = vmatpush1.xpose.msra.mxu0 0.0
    %1173 = vmatprep.subr.mxu0 0.0
    %1174 = vmatpush1.xpose.msra.mxu0 0.0
    %1175 = vmatprep.subr.mxu0 0.0
    %1176 = vmatpush1.xpose.msra.mxu0 0.0
    %1177 = vmatprep.subr.mxu0 0.0
    %1178 = vmatpush1.xpose.msra.mxu0 0.0
    %1179 = vmatprep.subr.mxu0 0.0
    %1180 = vmatpush1.xpose.msra.mxu0 0.0
    %1181 = vmatprep.subr.mxu0 0.0
    %1182 = vmatpush1.xpose.msra.mxu0 0.0
    %1183 = vmatprep.subr.mxu0 0.0
    %1184 = vmatpush1.xpose.msra.mxu0 0.0
    %1185 = vmatprep.subr.mxu0 0.0
    %1186 = vmatpush1.xpose.msra.mxu0 0.0
    %1187 = vmatprep.subr.mxu0 0.0
    %1188 = vmatpush1.xpose.msra.mxu0 0.0
    %1189 = vmatprep.subr.mxu0 0.0
    %1190 = vmatpush1.xpose.msra.mxu0 0.0
    %1191 = vmatprep.subr.mxu0 0.0
    %1192 = vmatpush1.xpose.msra.mxu0 0.0
    %1193 = vmatprep.subr.mxu0 0.0
    %1194 = vmatpush1.xpose.msra.mxu0 0.0
    %1195 = vmatprep.subr.mxu0 0.0
    %1196 = vmatpush1.xpose.msra.mxu0 0.0
    %1197 = vmatprep.subr.mxu0 0.0
    %1198 = vmatpush1.xpose.msra.mxu0 0.0
    %1199 = vmatprep.subr.mxu0 0.0
    %1200 = vmatpush1.xpose.msra.mxu0 0.0
    %1201 = vmatprep.subr.mxu0 0.0
    %1202 = vmatpush1.xpose.msra.mxu0 0.0
    %1203 = vmatprep.subr.mxu0 0.0
    %1204 = vmatpush1.xpose.msra.mxu0 0.0
    %1205 = vmatprep.subr.mxu0 0.0
    %1206 = vmatpush1.xpose.msra.mxu0 0.0
    %1207 = vmatprep.subr.mxu0 0.0
    %1208 = vmatpush1.xpose.msra.mxu0 0.0
    %1209 = vmatprep.subr.mxu0 0.0
    %1210 = vmatpush1.xpose.msra.mxu0 0.0
    %1211 = vmatprep.subr.mxu0 0.0
    %1212 = vmatpush1.xpose.msra.mxu0 0.0
    %1213 = vmatprep.subr.mxu0 0.0
    %1214 = vmatpush1.xpose.msra.mxu0 0.0
    %1215 = vmatprep.subr.mxu0 0.0
    %1216 = vmatpush1.xpose.msra.mxu0 0.0
    %1217 = vmatprep.subr.mxu0 0.0
    %1218 = vmatpush1.xpose.msra.mxu0 0.0
    %1219 = vmatprep.mubr.f32.mxu0 0.0
    %1220 = vmatmul.mubr.f32.gmra.mrb[0].mxu0 %v1151
    %v1221 = vpop.f32.mrb[0].mxu0
    %v1222 = vadd.f32 %v425, %v1221
    %v1223 = vpop.f32.mrb[0].mxu0
    %1224 = vdwg.mxu0
    %v1225 = vsel %vm435, %v1222, -inf
    %1226 = vmax.xlane.f32.xlu0 %v1225
    %v1227 = vpop.xlane.xlu0 %1226
    %v1228 = vsub.f32 %v1222, %v1227
    %v1229 = vmul.f32 %v1228, 1.442695
    %v1230 = vpow.pop %v1229
    %v1231 = vsel %vm435, %v1230, 0.0
    %1232 = vadd.xlane.f32.xlu0 %v1231
    %v1233 = vpop.xlane.xlu0 %1232
    %v1234 = vrcp.pop %v1233
    %v1235 = vmul.f32 %v1230, %v1234
    %1236 = vrot.lane.b32.xlu0 %v414, 104
    %v1237 = vpop.permute.xlu0 %1236
    %v1240 = vsel %vm435, %v1235, 0
    %1242 = vmatprep.subr.mxu0 0.0
    %1243 = vmatpush1.msra.mxu0 %v1237
    %1244 = vmatprep.subr.mxu0 0.0
    %1245 = vmatpush1.msra.mxu0 0.0
    %1246 = vmatprep.subr.mxu0 0.0
    %1247 = vmatpush1.msra.mxu0 0.0
    %1248 = vmatprep.subr.mxu0 0.0
    %1249 = vmatpush1.msra.mxu0 0.0
    %1250 = vmatprep.subr.mxu0 0.0
    %1251 = vmatpush1.msra.mxu0 0.0
    %1252 = vmatprep.subr.mxu0 0.0
    %1253 = vmatpush1.msra.mxu0 0.0
    %1254 = vmatprep.subr.mxu0 0.0
    %1255 = vmatpush1.msra.mxu0 0.0
    %1256 = vmatprep.subr.mxu0 0.0
    %1257 = vmatpush1.msra.mxu0 0.0
    %1258 = vmatprep.subr.mxu0 0.0
    %1259 = vmatpush1.msra.mxu0 0.0
    %1260 = vmatprep.subr.mxu0 0.0
    %1261 = vmatpush1.msra.mxu0 0.0
    %1262 = vmatprep.subr.mxu0 0.0
    %1263 = vmatpush1.msra.mxu0 0.0
    %1264 = vmatprep.subr.mxu0 0.0
    %1265 = vmatpush1.msra.mxu0 0.0
    %1266 = vmatprep.subr.mxu0 0.0
    %1267 = vmatpush1.msra.mxu0 0.0
    %1268 = vmatprep.subr.mxu0 0.0
    %1269 = vmatpush1.msra.mxu0 0.0
    %1270 = vmatprep.subr.mxu0 0.0
    %1271 = vmatpush1.msra.mxu0 0.0
    %1272 = vmatprep.subr.mxu0 0.0
    %1273 = vmatpush1.msra.mxu0 0.0
    %1274 = vmatprep.subr.mxu0 0.0
    %1275 = vmatpush1.msra.mxu0 0.0
    %1276 = vmatprep.subr.mxu0 0.0
    %1277 = vmatpush1.msra.mxu0 0.0
    %1278 = vmatprep.subr.mxu0 0.0
    %1279 = vmatpush1.msra.mxu0 0.0
    %1280 = vmatprep.subr.mxu0 0.0
    %1281 = vmatpush1.msra.mxu0 0.0
    %1282 = vmatprep.subr.mxu0 0.0
    %1283 = vmatpush1.msra.mxu0 0.0
    %1284 = vmatprep.subr.mxu0 0.0
    %1285 = vmatpush1.msra.mxu0 0.0
    %1286 = vmatprep.subr.mxu0 0.0
    %1287 = vmatpush1.msra.mxu0 0.0
    %1288 = vmatprep.subr.mxu0 0.0
    %1289 = vmatpush1.msra.mxu0 0.0
    %1290 = vmatprep.subr.mxu0 0.0
    %1291 = vmatpush1.msra.mxu0 0.0
    %1292 = vmatprep.subr.mxu0 0.0
    %1293 = vmatpush1.msra.mxu0 0.0
    %1294 = vmatprep.subr.mxu0 0.0
    %1295 = vmatpush1.msra.mxu0 0.0
    %1296 = vmatprep.subr.mxu0 0.0
    %1297 = vmatpush1.msra.mxu0 0.0
    %1298 = vmatprep.subr.mxu0 0.0
    %1299 = vmatpush1.msra.mxu0 0.0
    %1300 = vmatprep.subr.mxu0 0.0
    %1301 = vmatpush1.msra.mxu0 0.0
    %1302 = vmatprep.subr.mxu0 0.0
    %1303 = vmatpush1.msra.mxu0 0.0
    %1304 = vmatprep.subr.mxu0 0.0
    %1305 = vmatpush1.msra.mxu0 0.0
    %1306 = vmatprep.mubr.f32.mxu0 0.0
    %1307 = vmatmul.mubr.f32.gmra.mrb[0].mxu0 %v1240
    %v1308 = vpop.f32.mrb[0].mxu0
    %v1309 = vadd.f32 0.0, %v1308
    %v1310 = vpop.f32.mrb[0].mxu0
    %1311 = vdwg.mxu0
    %v1313 = vsel %vm435, %v1309, 0
    %1315 = vmatprep.subr.mxu0 0.0
    %1316 = vmatpush1.msra.mxu0 %v433
    %1317 = vmatprep.subr.mxu0 0.0
    %1318 = vmatpush1.msra.mxu0 0.0
    %1319 = vmatprep.subr.mxu0 0.0
    %1320 = vmatpush1.msra.mxu0 0.0
    %1321 = vmatprep.subr.mxu0 0.0
    %1322 = vmatpush1.msra.mxu0 0.0
    %1323 = vmatprep.subr.mxu0 0.0
    %1324 = vmatpush1.msra.mxu0 0.0
    %1325 = vmatprep.subr.mxu0 0.0
    %1326 = vmatpush1.msra.mxu0 0.0
    %1327 = vmatprep.subr.mxu0 0.0
    %1328 = vmatpush1.msra.mxu0 0.0
    %1329 = vmatprep.subr.mxu0 0.0
    %1330 = vmatpush1.msra.mxu0 0.0
    %1331 = vmatprep.subr.mxu0 0.0
    %1332 = vmatpush1.msra.mxu0 0.0
    %1333 = vmatprep.subr.mxu0 0.0
    %1334 = vmatpush1.msra.mxu0 0.0
    %1335 = vmatprep.subr.mxu0 0.0
    %1336 = vmatpush1.msra.mxu0 0.0
    %1337 = vmatprep.subr.mxu0 0.0
    %1338 = vmatpush1.msra.mxu0 0.0
    %1339 = vmatprep.subr.mxu0 0.0
    %1340 = vmatpush1.msra.mxu0 0.0
    %1341 = vmatprep.subr.mxu0 0.0
    %1342 = vmatpush1.msra.mxu0 0.0
    %1343 = vmatprep.subr.mxu0 0.0
    %1344 = vmatpush1.msra.mxu0 0.0
    %1345 = vmatprep.subr.mxu0 0.0
    %1346 = vmatpush1.msra.mxu0 0.0
    %1347 = vmatprep.subr.mxu0 0.0
    %1348 = vmatpush1.msra.mxu0 0.0
    %1349 = vmatprep.subr.mxu0 0.0
    %1350 = vmatpush1.msra.mxu0 0.0
    %1351 = vmatprep.subr.mxu0 0.0
    %1352 = vmatpush1.msra.mxu0 0.0
    %1353 = vmatprep.subr.mxu0 0.0
    %1354 = vmatpush1.msra.mxu0 0.0
    %1355 = vmatprep.subr.mxu0 0.0
    %1356 = vmatpush1.msra.mxu0 0.0
    %1357 = vmatprep.subr.mxu0 0.0
    %1358 = vmatpush1.msra.mxu0 0.0
    %1359 = vmatprep.subr.mxu0 0.0
    %1360 = vmatpush1.msra.mxu0 0.0
    %1361 = vmatprep.subr.mxu0 0.0
    %1362 = vmatpush1.msra.mxu0 0.0
    %1363 = vmatprep.subr.mxu0 0.0
    %1364 = vmatpush1.msra.mxu0 0.0
    %1365 = vmatprep.subr.mxu0 0.0
    %1366 = vmatpush1.msra.mxu0 0.0
    %1367 = vmatprep.subr.mxu0 0.0
    %1368 = vmatpush1.msra.mxu0 0.0
    %1369 = vmatprep.subr.mxu0 0.0
    %1370 = vmatpush1.msra.mxu0 0.0
    %1371 = vmatprep.subr.mxu0 0.0
    %1372 = vmatpush1.msra.mxu0 0.0
    %1373 = vmatprep.subr.mxu0 0.0
    %1374 = vmatpush1.msra.mxu0 0.0
    %1375 = vmatprep.subr.mxu0 0.0
    %1376 = vmatpush1.msra.mxu0 0.0
    %1377 = vmatprep.subr.mxu0 0.0
    %1378 = vmatpush1.msra.mxu0 0.0
    %1379 = vmatprep.mubr.f32.mxu0 0.0
    %1380 = vmatmul.mubr.f32.gmra.mrb[0].mxu0 %v1313
    %v1381 = vpop.f32.mrb[0].mxu0
    %v1382 = vadd.f32 0.0, %v1381
    %v1383 = vpop.f32.mrb[0].mxu0
    %1384 = vdwg.mxu0
    %v1385 = vadd.f32 %v1146, %v1382
    %v1387 = vlaneseq
    %v1388 = vshrl.u32 %v1387, 7
    %v1389 = vsub.s32 0, %v1388
    %v1390 = vrot.slane %v434, %v1389
    %v1392 = vadd.f32 %v1385, %v1390
    %1393 = vst.msk [vmem:[#allocation14] sm:$0xff] %vm150, %v1392
    %v1395 = vsel %vm435, %v233, 0
    %v1398 = vsel %vm435, %v325, 0
    %1400 = vmatprep.subr.mxu0 0.0
    %1401 = vmatpush1.xpose.msra.mxu0 %v1398
    %1402 = vmatprep.subr.mxu0 0.0
    %1403 = vmatpush1.xpose.msra.mxu0 0.0
    %1404 = vmatprep.subr.mxu0 0.0
    %1405 = vmatpush1.xpose.msra.mxu0 0.0
    %1406 = vmatprep.subr.mxu0 0.0
    %1407 = vmatpush1.xpose.msra.mxu0 0.0
    %1408 = vmatprep.subr.mxu0 0.0
    %1409 = vmatpush1.xpose.msra.mxu0 0.0
    %1410 = vmatprep.subr.mxu0 0.0
    %1411 = vmatpush1.xpose.msra.mxu0 0.0
    %1412 = vmatprep.subr.mxu0 0.0
    %1413 = vmatpush1.xpose.msra.mxu0 0.0
    %1414 = vmatprep.subr.mxu0 0.0
    %1415 = vmatpush1.xpose.msra.mxu0 0.0
    %1416 = vmatprep.subr.mxu0 0.0
    %1417 = vmatpush1.xpose.msra.mxu0 0.0
    %1418 = vmatprep.subr.mxu0 0.0
    %1419 = vmatpush1.xpose.msra.mxu0 0.0
    %1420 = vmatprep.subr.mxu0 0.0
    %1421 = vmatpush1.xpose.msra.mxu0 0.0
    %1422 = vmatprep.subr.mxu0 0.0
    %1423 = vmatpush1.xpose.msra.mxu0 0.0
    %1424 = vmatprep.subr.mxu0 0.0
    %1425 = vmatpush1.xpose.msra.mxu0 0.0
    %1426 = vmatprep.subr.mxu0 0.0
    %1427 = vmatpush1.xpose.msra.mxu0 0.0
    %1428 = vmatprep.subr.mxu0 0.0
    %1429 = vmatpush1.xpose.msra.mxu0 0.0
    %1430 = vmatprep.subr.mxu0 0.0
    %1431 = vmatpush1.xpose.msra.mxu0 0.0
    %1432 = vmatprep.subr.mxu0 0.0
    %1433 = vmatpush1.xpose.msra.mxu0 0.0
    %1434 = vmatprep.subr.mxu0 0.0
    %1435 = vmatpush1.xpose.msra.mxu0 0.0
    %1436 = vmatprep.subr.mxu0 0.0
    %1437 = vmatpush1.xpose.msra.mxu0 0.0
    %1438 = vmatprep.subr.mxu0 0.0
    %1439 = vmatpush1.xpose.msra.mxu0 0.0
    %1440 = vmatprep.subr.mxu0 0.0
    %1441 = vmatpush1.xpose.msra.mxu0 0.0
    %1442 = vmatprep.subr.mxu0 0.0
    %1443 = vmatpush1.xpose.msra.mxu0 0.0
    %1444 = vmatprep.subr.mxu0 0.0
    %1445 = vmatpush1.xpose.msra.mxu0 0.0
    %1446 = vmatprep.subr.mxu0 0.0
    %1447 = vmatpush1.xpose.msra.mxu0 0.0
    %1448 = vmatprep.subr.mxu0 0.0
    %1449 = vmatpush1.xpose.msra.mxu0 0.0
    %1450 = vmatprep.subr.mxu0 0.0
    %1451 = vmatpush1.xpose.msra.mxu0 0.0
    %1452 = vmatprep.subr.mxu0 0.0
    %1453 = vmatpush1.xpose.msra.mxu0 0.0
    %1454 = vmatprep.subr.mxu0 0.0
    %1455 = vmatpush1.xpose.msra.mxu0 0.0
    %1456 = vmatprep.subr.mxu0 0.0
    %1457 = vmatpush1.xpose.msra.mxu0 0.0
    %1458 = vmatprep.subr.mxu0 0.0
    %1459 = vmatpush1.xpose.msra.mxu0 0.0
    %1460 = vmatprep.subr.mxu0 0.0
    %1461 = vmatpush1.xpose.msra.mxu0 0.0
    %1462 = vmatprep.subr.mxu0 0.0
    %1463 = vmatpush1.xpose.msra.mxu0 0.0
    %1464 = vmatprep.mubr.f32.mxu0 0.0
    %1465 = vmatmul.mubr.f32.gmra.mrb[0].mxu0 %v1395
    %v1466 = vpop.f32.mrb[0].mxu0
    %v1467 = vadd.f32 %v426, %v1466
    %v1468 = vpop.f32.mrb[0].mxu0
    %1469 = vdwg.mxu0
    %v1470 = vsel %vm435, %v1467, -inf
    %1471 = vmax.xlane.f32.xlu0 %v1470
    %v1472 = vpop.xlane.xlu0 %1471
    %v1473 = vsub.f32 %v1467, %v1472
    %v1474 = vmul.f32 %v1473, 1.442695
    %v1475 = vpow.pop %v1474
    %v1476 = vsel %vm435, %v1475, 0.0
    %1477 = vadd.xlane.f32.xlu0 %v1476
    %v1478 = vpop.xlane.xlu0 %1477
    %v1479 = vrcp.pop %v1478
    %v1480 = vmul.f32 %v1475, %v1479
    %v1482 = vsel %vm435, %v1480, 0
    %1484 = vmatprep.subr.mxu0 0.0
    %1485 = vmatpush1.msra.mxu0 %v419
    %1486 = vmatprep.subr.mxu0 0.0
    %1487 = vmatpush1.msra.mxu0 0.0
    %1488 = vmatprep.subr.mxu0 0.0
    %1489 = vmatpush1.msra.mxu0 0.0
    %1490 = vmatprep.subr.mxu0 0.0
    %1491 = vmatpush1.msra.mxu0 0.0
    %1492 = vmatprep.subr.mxu0 0.0
    %1493 = vmatpush1.msra.mxu0 0.0
    %1494 = vmatprep.subr.mxu0 0.0
    %1495 = vmatpush1.msra.mxu0 0.0
    %1496 = vmatprep.subr.mxu0 0.0
    %1497 = vmatpush1.msra.mxu0 0.0
    %1498 = vmatprep.subr.mxu0 0.0
    %1499 = vmatpush1.msra.mxu0 0.0
    %1500 = vmatprep.subr.mxu0 0.0
    %1501 = vmatpush1.msra.mxu0 0.0
    %1502 = vmatprep.subr.mxu0 0.0
    %1503 = vmatpush1.msra.mxu0 0.0
    %1504 = vmatprep.subr.mxu0 0.0
    %1505 = vmatpush1.msra.mxu0 0.0
    %1506 = vmatprep.subr.mxu0 0.0
    %1507 = vmatpush1.msra.mxu0 0.0
    %1508 = vmatprep.subr.mxu0 0.0
    %1509 = vmatpush1.msra.mxu0 0.0
    %1510 = vmatprep.subr.mxu0 0.0
    %1511 = vmatpush1.msra.mxu0 0.0
    %1512 = vmatprep.subr.mxu0 0.0
    %1513 = vmatpush1.msra.mxu0 0.0
    %1514 = vmatprep.subr.mxu0 0.0
    %1515 = vmatpush1.msra.mxu0 0.0
    %1516 = vmatprep.subr.mxu0 0.0
    %1517 = vmatpush1.msra.mxu0 0.0
    %1518 = vmatprep.subr.mxu0 0.0
    %1519 = vmatpush1.msra.mxu0 0.0
    %1520 = vmatprep.subr.mxu0 0.0
    %1521 = vmatpush1.msra.mxu0 0.0
    %1522 = vmatprep.subr.mxu0 0.0
    %1523 = vmatpush1.msra.mxu0 0.0
    %1524 = vmatprep.subr.mxu0 0.0
    %1525 = vmatpush1.msra.mxu0 0.0
    %1526 = vmatprep.subr.mxu0 0.0
    %1527 = vmatpush1.msra.mxu0 0.0
    %1528 = vmatprep.subr.mxu0 0.0
    %1529 = vmatpush1.msra.mxu0 0.0
    %1530 = vmatprep.subr.mxu0 0.0
    %1531 = vmatpush1.msra.mxu0 0.0
    %1532 = vmatprep.subr.mxu0 0.0
    %1533 = vmatpush1.msra.mxu0 0.0
    %1534 = vmatprep.subr.mxu0 0.0
    %1535 = vmatpush1.msra.mxu0 0.0
    %1536 = vmatprep.subr.mxu0 0.0
    %1537 = vmatpush1.msra.mxu0 0.0
    %1538 = vmatprep.subr.mxu0 0.0
    %1539 = vmatpush1.msra.mxu0 0.0
    %1540 = vmatprep.subr.mxu0 0.0
    %1541 = vmatpush1.msra.mxu0 0.0
    %1542 = vmatprep.subr.mxu0 0.0
    %1543 = vmatpush1.msra.mxu0 0.0
    %1544 = vmatprep.subr.mxu0 0.0
    %1545 = vmatpush1.msra.mxu0 0.0
    %1546 = vmatprep.subr.mxu0 0.0
    %1547 = vmatpush1.msra.mxu0 0.0
    %1548 = vmatprep.mubr.f32.mxu0 0.0
    %1549 = vmatmul.mubr.f32.gmra.mrb[0].mxu0 %v1482
    %v1550 = vpop.f32.mrb[0].mxu0
    %v1551 = vadd.f32 0.0, %v1550
    %v1552 = vpop.f32.mrb[0].mxu0
    %1553 = vdwg.mxu0
    %1554 = vrot.lane.b32.xlu0 %v233, 120
    %v1555 = vpop.permute.xlu0 %1554
    %1556 = vrot.lane.b32.xlu0 %v325, 120
    %v1557 = vpop.permute.xlu0 %1556
    %v1558 = vsel %vm435, %v1555, 0
    %v1560 = vsel %vm435, %v1557, 0
    %1562 = vmatprep.subr.mxu0 0.0
    %1563 = vmatpush1.xpose.msra.mxu0 %v1560
    %1564 = vmatprep.subr.mxu0 0.0
    %1565 = vmatpush1.xpose.msra.mxu0 0.0
    %1566 = vmatprep.subr.mxu0 0.0
    %1567 = vmatpush1.xpose.msra.mxu0 0.0
    %1568 = vmatprep.subr.mxu0 0.0
    %1569 = vmatpush1.xpose.msra.mxu0 0.0
    %1570 = vmatprep.subr.mxu0 0.0
    %1571 = vmatpush1.xpose.msra.mxu0 0.0
    %1572 = vmatprep.subr.mxu0 0.0
    %1573 = vmatpush1.xpose.msra.mxu0 0.0
    %1574 = vmatprep.subr.mxu0 0.0
    %1575 = vmatpush1.xpose.msra.mxu0 0.0
    %1576 = vmatprep.subr.mxu0 0.0
    %1577 = vmatpush1.xpose.msra.mxu0 0.0
    %1578 = vmatprep.subr.mxu0 0.0
    %1579 = vmatpush1.xpose.msra.mxu0 0.0
    %1580 = vmatprep.subr.mxu0 0.0
    %1581 = vmatpush1.xpose.msra.mxu0 0.0
    %1582 = vmatprep.subr.mxu0 0.0
    %1583 = vmatpush1.xpose.msra.mxu0 0.0
    %1584 = vmatprep.subr.mxu0 0.0
    %1585 = vmatpush1.xpose.msra.mxu0 0.0
    %1586 = vmatprep.subr.mxu0 0.0
    %1587 = vmatpush1.xpose.msra.mxu0 0.0
    %1588 = vmatprep.subr.mxu0 0.0
    %1589 = vmatpush1.xpose.msra.mxu0 0.0
    %1590 = vmatprep.subr.mxu0 0.0
    %1591 = vmatpush1.xpose.msra.mxu0 0.0
    %1592 = vmatprep.subr.mxu0 0.0
    %1593 = vmatpush1.xpose.msra.mxu0 0.0
    %1594 = vmatprep.subr.mxu0 0.0
    %1595 = vmatpush1.xpose.msra.mxu0 0.0
    %1596 = vmatprep.subr.mxu0 0.0
    %1597 = vmatpush1.xpose.msra.mxu0 0.0
    %1598 = vmatprep.subr.mxu0 0.0
    %1599 = vmatpush1.xpose.msra.mxu0 0.0
    %1600 = vmatprep.subr.mxu0 0.0
    %1601 = vmatpush1.xpose.msra.mxu0 0.0
    %1602 = vmatprep.subr.mxu0 0.0
    %1603 = vmatpush1.xpose.msra.mxu0 0.0
    %1604 = vmatprep.subr.mxu0 0.0
    %1605 = vmatpush1.xpose.msra.mxu0 0.0
    %1606 = vmatprep.subr.mxu0 0.0
    %1607 = vmatpush1.xpose.msra.mxu0 0.0
    %1608 = vmatprep.subr.mxu0 0.0
    %1609 = vmatpush1.xpose.msra.mxu0 0.0
    %1610 = vmatprep.subr.mxu0 0.0
    %1611 = vmatpush1.xpose.msra.mxu0 0.0
    %1612 = vmatprep.subr.mxu0 0.0
    %1613 = vmatpush1.xpose.msra.mxu0 0.0
    %1614 = vmatprep.subr.mxu0 0.0
    %1615 = vmatpush1.xpose.msra.mxu0 0.0
    %1616 = vmatprep.subr.mxu0 0.0
    %1617 = vmatpush1.xpose.msra.mxu0 0.0
    %1618 = vmatprep.subr.mxu0 0.0
    %1619 = vmatpush1.xpose.msra.mxu0 0.0
    %1620 = vmatprep.subr.mxu0 0.0
    %1621 = vmatpush1.xpose.msra.mxu0 0.0
    %1622 = vmatprep.subr.mxu0 0.0
    %1623 = vmatpush1.xpose.msra.mxu0 0.0
    %1624 = vmatprep.subr.mxu0 0.0
    %1625 = vmatpush1.xpose.msra.mxu0 0.0
    %1626 = vmatprep.mubr.f32.mxu0 0.0
    %1627 = vmatmul.mubr.f32.gmra.mrb[0].mxu0 %v1558
    %v1628 = vpop.f32.mrb[0].mxu0
    %v1629 = vadd.f32 %v427, %v1628
    %v1630 = vpop.f32.mrb[0].mxu0
    %1631 = vdwg.mxu0
    %v1632 = vsel %vm435, %v1629, -inf
    %1633 = vmax.xlane.f32.xlu0 %v1632
    %v1634 = vpop.xlane.xlu0 %1633
    %v1635 = vsub.f32 %v1629, %v1634
    %v1636 = vmul.f32 %v1635, 1.442695
    %v1637 = vpow.pop %v1636
    %v1638 = vsel %vm435, %v1637, 0.0
    %1639 = vadd.xlane.f32.xlu0 %v1638
    %v1640 = vpop.xlane.xlu0 %1639
    %v1641 = vrcp.pop %v1640
    %v1642 = vmul.f32 %v1637, %v1641
    %1644 = vrot.lane.b32.xlu0 %v419, 120
    %v1645 = vpop.permute.xlu0 %1644
    %v1648 = vsel %vm435, %v1642, 0
    %1650 = vmatprep.subr.mxu0 0.0
    %1651 = vmatpush1.msra.mxu0 %v1645
    %1652 = vmatprep.subr.mxu0 0.0
    %1653 = vmatpush1.msra.mxu0 0.0
    %1654 = vmatprep.subr.mxu0 0.0
    %1655 = vmatpush1.msra.mxu0 0.0
    %1656 = vmatprep.subr.mxu0 0.0
    %1657 = vmatpush1.msra.mxu0 0.0
    %1658 = vmatprep.subr.mxu0 0.0
    %1659 = vmatpush1.msra.mxu0 0.0
    %1660 = vmatprep.subr.mxu0 0.0
    %1661 = vmatpush1.msra.mxu0 0.0
    %1662 = vmatprep.subr.mxu0 0.0
    %1663 = vmatpush1.msra.mxu0 0.0
    %1664 = vmatprep.subr.mxu0 0.0
    %1665 = vmatpush1.msra.mxu0 0.0
    %1666 = vmatprep.subr.mxu0 0.0
    %1667 = vmatpush1.msra.mxu0 0.0
    %1668 = vmatprep.subr.mxu0 0.0
    %1669 = vmatpush1.msra.mxu0 0.0
    %1670 = vmatprep.subr.mxu0 0.0
    %1671 = vmatpush1.msra.mxu0 0.0
    %1672 = vmatprep.subr.mxu0 0.0
    %1673 = vmatpush1.msra.mxu0 0.0
    %1674 = vmatprep.subr.mxu0 0.0
    %1675 = vmatpush1.msra.mxu0 0.0
    %1676 = vmatprep.subr.mxu0 0.0
    %1677 = vmatpush1.msra.mxu0 0.0
    %1678 = vmatprep.subr.mxu0 0.0
    %1679 = vmatpush1.msra.mxu0 0.0
    %1680 = vmatprep.subr.mxu0 0.0
    %1681 = vmatpush1.msra.mxu0 0.0
    %1682 = vmatprep.subr.mxu0 0.0
    %1683 = vmatpush1.msra.mxu0 0.0
    %1684 = vmatprep.subr.mxu0 0.0
    %1685 = vmatpush1.msra.mxu0 0.0
    %1686 = vmatprep.subr.mxu0 0.0
    %1687 = vmatpush1.msra.mxu0 0.0
    %1688 = vmatprep.subr.mxu0 0.0
    %1689 = vmatpush1.msra.mxu0 0.0
    %1690 = vmatprep.subr.mxu0 0.0
    %1691 = vmatpush1.msra.mxu0 0.0
    %1692 = vmatprep.subr.mxu0 0.0
    %1693 = vmatpush1.msra.mxu0 0.0
    %1694 = vmatprep.subr.mxu0 0.0
    %1695 = vmatpush1.msra.mxu0 0.0
    %1696 = vmatprep.subr.mxu0 0.0
    %1697 = vmatpush1.msra.mxu0 0.0
    %1698 = vmatprep.subr.mxu0 0.0
    %1699 = vmatpush1.msra.mxu0 0.0
    %1700 = vmatprep.subr.mxu0 0.0
    %1701 = vmatpush1.msra.mxu0 0.0
    %1702 = vmatprep.subr.mxu0 0.0
    %1703 = vmatpush1.msra.mxu0 0.0
    %1704 = vmatprep.subr.mxu0 0.0
    %1705 = vmatpush1.msra.mxu0 0.0
    %1706 = vmatprep.subr.mxu0 0.0
    %1707 = vmatpush1.msra.mxu0 0.0
    %1708 = vmatprep.subr.mxu0 0.0
    %1709 = vmatpush1.msra.mxu0 0.0
    %1710 = vmatprep.subr.mxu0 0.0
    %1711 = vmatpush1.msra.mxu0 0.0
    %1712 = vmatprep.subr.mxu0 0.0
    %1713 = vmatpush1.msra.mxu0 0.0
    %1714 = vmatprep.mubr.f32.mxu0 0.0
    %1715 = vmatmul.mubr.f32.gmra.mrb[0].mxu0 %v1648
    %v1716 = vpop.f32.mrb[0].mxu0
    %v1717 = vadd.f32 0.0, %v1716
    %v1718 = vpop.f32.mrb[0].mxu0
    %1719 = vdwg.mxu0
    %v1721 = vsel %vm435, %v1717, 0
    %1723 = vmatprep.subr.mxu0 0.0
    %1724 = vmatpush1.msra.mxu0 %v431
    %1725 = vmatprep.subr.mxu0 0.0
    %1726 = vmatpush1.msra.mxu0 0.0
    %1727 = vmatprep.subr.mxu0 0.0
    %1728 = vmatpush1.msra.mxu0 0.0
    %1729 = vmatprep.subr.mxu0 0.0
    %1730 = vmatpush1.msra.mxu0 0.0
    %1731 = vmatprep.subr.mxu0 0.0
    %1732 = vmatpush1.msra.mxu0 0.0
    %1733 = vmatprep.subr.mxu0 0.0
    %1734 = vmatpush1.msra.mxu0 0.0
    %1735 = vmatprep.subr.mxu0 0.0
    %1736 = vmatpush1.msra.mxu0 0.0
    %1737 = vmatprep.subr.mxu0 0.0
    %1738 = vmatpush1.msra.mxu0 0.0
    %1739 = vmatprep.subr.mxu0 0.0
    %1740 = vmatpush1.msra.mxu0 0.0
    %1741 = vmatprep.subr.mxu0 0.0
    %1742 = vmatpush1.msra.mxu0 0.0
    %1743 = vmatprep.subr.mxu0 0.0
    %1744 = vmatpush1.msra.mxu0 0.0
    %1745 = vmatprep.subr.mxu0 0.0
    %1746 = vmatpush1.msra.mxu0 0.0
    %1747 = vmatprep.subr.mxu0 0.0
    %1748 = vmatpush1.msra.mxu0 0.0
    %1749 = vmatprep.subr.mxu0 0.0
    %1750 = vmatpush1.msra.mxu0 0.0
    %1751 = vmatprep.subr.mxu0 0.0
    %1752 = vmatpush1.msra.mxu0 0.0
    %1753 = vmatprep.subr.mxu0 0.0
    %1754 = vmatpush1.msra.mxu0 0.0
    %1755 = vmatprep.subr.mxu0 0.0
    %1756 = vmatpush1.msra.mxu0 0.0
    %1757 = vmatprep.subr.mxu0 0.0
    %1758 = vmatpush1.msra.mxu0 0.0
    %1759 = vmatprep.subr.mxu0 0.0
    %1760 = vmatpush1.msra.mxu0 0.0
    %1761 = vmatprep.subr.mxu0 0.0
    %1762 = vmatpush1.msra.mxu0 0.0
    %1763 = vmatprep.subr.mxu0 0.0
    %1764 = vmatpush1.msra.mxu0 0.0
    %1765 = vmatprep.subr.mxu0 0.0
    %1766 = vmatpush1.msra.mxu0 0.0
    %1767 = vmatprep.subr.mxu0 0.0
    %1768 = vmatpush1.msra.mxu0 0.0
    %1769 = vmatprep.subr.mxu0 0.0
    %1770 = vmatpush1.msra.mxu0 0.0
    %1771 = vmatprep.subr.mxu0 0.0
    %1772 = vmatpush1.msra.mxu0 0.0
    %1773 = vmatprep.subr.mxu0 0.0
    %1774 = vmatpush1.msra.mxu0 0.0
    %1775 = vmatprep.subr.mxu0 0.0
    %1776 = vmatpush1.msra.mxu0 0.0
    %1777 = vmatprep.subr.mxu0 0.0
    %1778 = vmatpush1.msra.mxu0 0.0
    %1779 = vmatprep.subr.mxu0 0.0
    %1780 = vmatpush1.msra.mxu0 0.0
    %1781 = vmatprep.subr.mxu0 0.0
    %1782 = vmatpush1.msra.mxu0 0.0
    %1783 = vmatprep.subr.mxu0 0.0
    %1784 = vmatpush1.msra.mxu0 0.0
    %1785 = vmatprep.subr.mxu0 0.0
    %1786 = vmatpush1.msra.mxu0 0.0
    %1787 = vmatprep.mubr.f32.mxu0 0.0
    %1788 = vmatmul.mubr.f32.gmra.mrb[0].mxu0 %v1721
    %v1789 = vpop.f32.mrb[0].mxu0
    %v1790 = vadd.f32 0.0, %v1789
    %v1791 = vpop.f32.mrb[0].mxu0
    %1792 = vdwg.mxu0
    %v1794 = vsel %vm435, %v1551, 0
    %1796 = vmatprep.subr.mxu0 0.0
    %1797 = vmatpush1.msra.mxu0 %v430
    %1798 = vmatprep.subr.mxu0 0.0
    %1799 = vmatpush1.msra.mxu0 0.0
    %1800 = vmatprep.subr.mxu0 0.0
    %1801 = vmatpush1.msra.mxu0 0.0
    %1802 = vmatprep.subr.mxu0 0.0
    %1803 = vmatpush1.msra.mxu0 0.0
    %1804 = vmatprep.subr.mxu0 0.0
    %1805 = vmatpush1.msra.mxu0 0.0
    %1806 = vmatprep.subr.mxu0 0.0
    %1807 = vmatpush1.msra.mxu0 0.0
    %1808 = vmatprep.subr.mxu0 0.0
    %1809 = vmatpush1.msra.mxu0 0.0
    %1810 = vmatprep.subr.mxu0 0.0
    %1811 = vmatpush1.msra.mxu0 0.0
    %1812 = vmatprep.subr.mxu0 0.0
    %1813 = vmatpush1.msra.mxu0 0.0
    %1814 = vmatprep.subr.mxu0 0.0
    %1815 = vmatpush1.msra.mxu0 0.0
    %1816 = vmatprep.subr.mxu0 0.0
    %1817 = vmatpush1.msra.mxu0 0.0
    %1818 = vmatprep.subr.mxu0 0.0
    %1819 = vmatpush1.msra.mxu0 0.0
    %1820 = vmatprep.subr.mxu0 0.0
    %1821 = vmatpush1.msra.mxu0 0.0
    %1822 = vmatprep.subr.mxu0 0.0
    %1823 = vmatpush1.msra.mxu0 0.0
    %1824 = vmatprep.subr.mxu0 0.0
    %1825 = vmatpush1.msra.mxu0 0.0
    %1826 = vmatprep.subr.mxu0 0.0
    %1827 = vmatpush1.msra.mxu0 0.0
    %1828 = vmatprep.subr.mxu0 0.0
    %1829 = vmatpush1.msra.mxu0 0.0
    %1830 = vmatprep.subr.mxu0 0.0
    %1831 = vmatpush1.msra.mxu0 0.0
    %1832 = vmatprep.subr.mxu0 0.0
    %1833 = vmatpush1.msra.mxu0 0.0
    %1834 = vmatprep.subr.mxu0 0.0
    %1835 = vmatpush1.msra.mxu0 0.0
    %1836 = vmatprep.subr.mxu0 0.0
    %1837 = vmatpush1.msra.mxu0 0.0
    %1838 = vmatprep.subr.mxu0 0.0
    %1839 = vmatpush1.msra.mxu0 0.0
    %1840 = vmatprep.subr.mxu0 0.0
    %1841 = vmatpush1.msra.mxu0 0.0
    %1842 = vmatprep.subr.mxu0 0.0
    %1843 = vmatpush1.msra.mxu0 0.0
    %1844 = vmatprep.subr.mxu0 0.0
    %1845 = vmatpush1.msra.mxu0 0.0
    %1846 = vmatprep.subr.mxu0 0.0
    %1847 = vmatpush1.msra.mxu0 0.0
    %1848 = vmatprep.subr.mxu0 0.0
    %1849 = vmatpush1.msra.mxu0 0.0
    %1850 = vmatprep.subr.mxu0 0.0
    %1851 = vmatpush1.msra.mxu0 0.0
    %1852 = vmatprep.subr.mxu0 0.0
    %1853 = vmatpush1.msra.mxu0 0.0
    %1854 = vmatprep.subr.mxu0 0.0
    %1855 = vmatpush1.msra.mxu0 0.0
    %1856 = vmatprep.subr.mxu0 0.0
    %1857 = vmatpush1.msra.mxu0 0.0
    %1858 = vmatprep.subr.mxu0 0.0
    %1859 = vmatpush1.msra.mxu0 0.0
    %1860 = vmatprep.mubr.f32.mxu0 0.0
    %1861 = vmatmul.mubr.f32.gmra.mrb[0].mxu0 %v1794
    %v1862 = vpop.f32.mrb[0].mxu0
    %v1863 = vadd.f32 %v1790, %v1862
    %v1864 = vpop.f32.mrb[0].mxu0
    %1865 = vdwg.mxu0
    %1866 = vrot.lane.b32.xlu0 %v233, 112
    %v1867 = vpop.permute.xlu0 %1866
    %1868 = vrot.lane.b32.xlu0 %v325, 112
    %v1869 = vpop.permute.xlu0 %1868
    %v1870 = vsel %vm435, %v1867, 0
    %v1872 = vsel %vm435, %v1869, 0
    %1874 = vmatprep.subr.mxu0 0.0
    %1875 = vmatpush1.xpose.msra.mxu0 %v1872
    %1876 = vmatprep.subr.mxu0 0.0
    %1877 = vmatpush1.xpose.msra.mxu0 0.0
    %1878 = vmatprep.subr.mxu0 0.0
    %1879 = vmatpush1.xpose.msra.mxu0 0.0
    %1880 = vmatprep.subr.mxu0 0.0
    %1881 = vmatpush1.xpose.msra.mxu0 0.0
    %1882 = vmatprep.subr.mxu0 0.0
    %1883 = vmatpush1.xpose.msra.mxu0 0.0
    %1884 = vmatprep.subr.mxu0 0.0
    %1885 = vmatpush1.xpose.msra.mxu0 0.0
    %1886 = vmatprep.subr.mxu0 0.0
    %1887 = vmatpush1.xpose.msra.mxu0 0.0
    %1888 = vmatprep.subr.mxu0 0.0
    %1889 = vmatpush1.xpose.msra.mxu0 0.0
    %1890 = vmatprep.subr.mxu0 0.0
    %1891 = vmatpush1.xpose.msra.mxu0 0.0
    %1892 = vmatprep.subr.mxu0 0.0
    %1893 = vmatpush1.xpose.msra.mxu0 0.0
    %1894 = vmatprep.subr.mxu0 0.0
    %1895 = vmatpush1.xpose.msra.mxu0 0.0
    %1896 = vmatprep.subr.mxu0 0.0
    %1897 = vmatpush1.xpose.msra.mxu0 0.0
    %1898 = vmatprep.subr.mxu0 0.0
    %1899 = vmatpush1.xpose.msra.mxu0 0.0
    %1900 = vmatprep.subr.mxu0 0.0
    %1901 = vmatpush1.xpose.msra.mxu0 0.0
    %1902 = vmatprep.subr.mxu0 0.0
    %1903 = vmatpush1.xpose.msra.mxu0 0.0
    %1904 = vmatprep.subr.mxu0 0.0
    %1905 = vmatpush1.xpose.msra.mxu0 0.0
    %1906 = vmatprep.subr.mxu0 0.0
    %1907 = vmatpush1.xpose.msra.mxu0 0.0
    %1908 = vmatprep.subr.mxu0 0.0
    %1909 = vmatpush1.xpose.msra.mxu0 0.0
    %1910 = vmatprep.subr.mxu0 0.0
    %1911 = vmatpush1.xpose.msra.mxu0 0.0
    %1912 = vmatprep.subr.mxu0 0.0
    %1913 = vmatpush1.xpose.msra.mxu0 0.0
    %1914 = vmatprep.subr.mxu0 0.0
    %1915 = vmatpush1.xpose.msra.mxu0 0.0
    %1916 = vmatprep.subr.mxu0 0.0
    %1917 = vmatpush1.xpose.msra.mxu0 0.0
    %1918 = vmatprep.subr.mxu0 0.0
    %1919 = vmatpush1.xpose.msra.mxu0 0.0
    %1920 = vmatprep.subr.mxu0 0.0
    %1921 = vmatpush1.xpose.msra.mxu0 0.0
    %1922 = vmatprep.subr.mxu0 0.0
    %1923 = vmatpush1.xpose.msra.mxu0 0.0
    %1924 = vmatprep.subr.mxu0 0.0
    %1925 = vmatpush1.xpose.msra.mxu0 0.0
    %1926 = vmatprep.subr.mxu0 0.0
    %1927 = vmatpush1.xpose.msra.mxu0 0.0
    %1928 = vmatprep.subr.mxu0 0.0
    %1929 = vmatpush1.xpose.msra.mxu0 0.0
    %1930 = vmatprep.subr.mxu0 0.0
    %1931 = vmatpush1.xpose.msra.mxu0 0.0
    %1932 = vmatprep.subr.mxu0 0.0
    %1933 = vmatpush1.xpose.msra.mxu0 0.0
    %1934 = vmatprep.subr.mxu0 0.0
    %1935 = vmatpush1.xpose.msra.mxu0 0.0
    %1936 = vmatprep.subr.mxu0 0.0
    %1937 = vmatpush1.xpose.msra.mxu0 0.0
    %1938 = vmatprep.mubr.f32.mxu0 0.0
    %1939 = vmatmul.mubr.f32.gmra.mrb[0].mxu0 %v1870
    %v1940 = vpop.f32.mrb[0].mxu0
    %v1941 = vadd.f32 %v428, %v1940
    %v1942 = vpop.f32.mrb[0].mxu0
    %1943 = vdwg.mxu0
    %v1944 = vsel %vm435, %v1941, -inf
    %1945 = vmax.xlane.f32.xlu0 %v1944
    %v1946 = vpop.xlane.xlu0 %1945
    %v1947 = vsub.f32 %v1941, %v1946
    %v1948 = vmul.f32 %v1947, 1.442695
    %v1949 = vpow.pop %v1948
    %v1950 = vsel %vm435, %v1949, 0.0
    %1951 = vadd.xlane.f32.xlu0 %v1950
    %v1952 = vpop.xlane.xlu0 %1951
    %v1953 = vrcp.pop %v1952
    %v1954 = vmul.f32 %v1949, %v1953
    %1955 = vrot.lane.b32.xlu0 %v419, 112
    %v1956 = vpop.permute.xlu0 %1955
    %v1959 = vsel %vm435, %v1954, 0
    %1961 = vmatprep.subr.mxu0 0.0
    %1962 = vmatpush1.msra.mxu0 %v1956
    %1963 = vmatprep.subr.mxu0 0.0
    %1964 = vmatpush1.msra.mxu0 0.0
    %1965 = vmatprep.subr.mxu0 0.0
    %1966 = vmatpush1.msra.mxu0 0.0
    %1967 = vmatprep.subr.mxu0 0.0
    %1968 = vmatpush1.msra.mxu0 0.0
    %1969 = vmatprep.subr.mxu0 0.0
    %1970 = vmatpush1.msra.mxu0 0.0
    %1971 = vmatprep.subr.mxu0 0.0
    %1972 = vmatpush1.msra.mxu0 0.0
    %1973 = vmatprep.subr.mxu0 0.0
    %1974 = vmatpush1.msra.mxu0 0.0
    %1975 = vmatprep.subr.mxu0 0.0
    %1976 = vmatpush1.msra.mxu0 0.0
    %1977 = vmatprep.subr.mxu0 0.0
    %1978 = vmatpush1.msra.mxu0 0.0
    %1979 = vmatprep.subr.mxu0 0.0
    %1980 = vmatpush1.msra.mxu0 0.0
    %1981 = vmatprep.subr.mxu0 0.0
    %1982 = vmatpush1.msra.mxu0 0.0
    %1983 = vmatprep.subr.mxu0 0.0
    %1984 = vmatpush1.msra.mxu0 0.0
    %1985 = vmatprep.subr.mxu0 0.0
    %1986 = vmatpush1.msra.mxu0 0.0
    %1987 = vmatprep.subr.mxu0 0.0
    %1988 = vmatpush1.msra.mxu0 0.0
    %1989 = vmatprep.subr.mxu0 0.0
    %1990 = vmatpush1.msra.mxu0 0.0
    %1991 = vmatprep.subr.mxu0 0.0
    %1992 = vmatpush1.msra.mxu0 0.0
    %1993 = vmatprep.subr.mxu0 0.0
    %1994 = vmatpush1.msra.mxu0 0.0
    %1995 = vmatprep.subr.mxu0 0.0
    %1996 = vmatpush1.msra.mxu0 0.0
    %1997 = vmatprep.subr.mxu0 0.0
    %1998 = vmatpush1.msra.mxu0 0.0
    %1999 = vmatprep.subr.mxu0 0.0
    %2000 = vmatpush1.msra.mxu0 0.0
    %2001 = vmatprep.subr.mxu0 0.0
    %2002 = vmatpush1.msra.mxu0 0.0
    %2003 = vmatprep.subr.mxu0 0.0
    %2004 = vmatpush1.msra.mxu0 0.0
    %2005 = vmatprep.subr.mxu0 0.0
    %2006 = vmatpush1.msra.mxu0 0.0
    %2007 = vmatprep.subr.mxu0 0.0
    %2008 = vmatpush1.msra.mxu0 0.0
    %2009 = vmatprep.subr.mxu0 0.0
    %2010 = vmatpush1.msra.mxu0 0.0
    %2011 = vmatprep.subr.mxu0 0.0
    %2012 = vmatpush1.msra.mxu0 0.0
    %2013 = vmatprep.subr.mxu0 0.0
    %2014 = vmatpush1.msra.mxu0 0.0
    %2015 = vmatprep.subr.mxu0 0.0
    %2016 = vmatpush1.msra.mxu0 0.0
    %2017 = vmatprep.subr.mxu0 0.0
    %2018 = vmatpush1.msra.mxu0 0.0
    %2019 = vmatprep.subr.mxu0 0.0
    %2020 = vmatpush1.msra.mxu0 0.0
    %2021 = vmatprep.subr.mxu0 0.0
    %2022 = vmatpush1.msra.mxu0 0.0
    %2023 = vmatprep.subr.mxu0 0.0
    %2024 = vmatpush1.msra.mxu0 0.0
    %2025 = vmatprep.mubr.f32.mxu0 0.0
    %2026 = vmatmul.mubr.f32.gmra.mrb[0].mxu0 %v1959
    %v2027 = vpop.f32.mrb[0].mxu0
    %v2028 = vadd.f32 0.0, %v2027
    %v2029 = vpop.f32.mrb[0].mxu0
    %2030 = vdwg.mxu0
    %v2032 = vsel %vm435, %v2028, 0
    %2034 = vmatprep.subr.mxu0 0.0
    %2035 = vmatpush1.msra.mxu0 %v432
    %2036 = vmatprep.subr.mxu0 0.0
    %2037 = vmatpush1.msra.mxu0 0.0
    %2038 = vmatprep.subr.mxu0 0.0
    %2039 = vmatpush1.msra.mxu0 0.0
    %2040 = vmatprep.subr.mxu0 0.0
    %2041 = vmatpush1.msra.mxu0 0.0
    %2042 = vmatprep.subr.mxu0 0.0
    %2043 = vmatpush1.msra.mxu0 0.0
    %2044 = vmatprep.subr.mxu0 0.0
    %2045 = vmatpush1.msra.mxu0 0.0
    %2046 = vmatprep.subr.mxu0 0.0
    %2047 = vmatpush1.msra.mxu0 0.0
    %2048 = vmatprep.subr.mxu0 0.0
    %2049 = vmatpush1.msra.mxu0 0.0
    %2050 = vmatprep.subr.mxu0 0.0
    %2051 = vmatpush1.msra.mxu0 0.0
    %2052 = vmatprep.subr.mxu0 0.0
    %2053 = vmatpush1.msra.mxu0 0.0
    %2054 = vmatprep.subr.mxu0 0.0
    %2055 = vmatpush1.msra.mxu0 0.0
    %2056 = vmatprep.subr.mxu0 0.0
    %2057 = vmatpush1.msra.mxu0 0.0
    %2058 = vmatprep.subr.mxu0 0.0
    %2059 = vmatpush1.msra.mxu0 0.0
    %2060 = vmatprep.subr.mxu0 0.0
    %2061 = vmatpush1.msra.mxu0 0.0
    %2062 = vmatprep.subr.mxu0 0.0
    %2063 = vmatpush1.msra.mxu0 0.0
    %2064 = vmatprep.subr.mxu0 0.0
    %2065 = vmatpush1.msra.mxu0 0.0
    %2066 = vmatprep.subr.mxu0 0.0
    %2067 = vmatpush1.msra.mxu0 0.0
    %2068 = vmatprep.subr.mxu0 0.0
    %2069 = vmatpush1.msra.mxu0 0.0
    %2070 = vmatprep.subr.mxu0 0.0
    %2071 = vmatpush1.msra.mxu0 0.0
    %2072 = vmatprep.subr.mxu0 0.0
    %2073 = vmatpush1.msra.mxu0 0.0
    %2074 = vmatprep.subr.mxu0 0.0
    %2075 = vmatpush1.msra.mxu0 0.0
    %2076 = vmatprep.subr.mxu0 0.0
    %2077 = vmatpush1.msra.mxu0 0.0
    %2078 = vmatprep.subr.mxu0 0.0
    %2079 = vmatpush1.msra.mxu0 0.0
    %2080 = vmatprep.subr.mxu0 0.0
    %2081 = vmatpush1.msra.mxu0 0.0
    %2082 = vmatprep.subr.mxu0 0.0
    %2083 = vmatpush1.msra.mxu0 0.0
    %2084 = vmatprep.subr.mxu0 0.0
    %2085 = vmatpush1.msra.mxu0 0.0
    %2086 = vmatprep.subr.mxu0 0.0
    %2087 = vmatpush1.msra.mxu0 0.0
    %2088 = vmatprep.subr.mxu0 0.0
    %2089 = vmatpush1.msra.mxu0 0.0
    %2090 = vmatprep.subr.mxu0 0.0
    %2091 = vmatpush1.msra.mxu0 0.0
    %2092 = vmatprep.subr.mxu0 0.0
    %2093 = vmatpush1.msra.mxu0 0.0
    %2094 = vmatprep.subr.mxu0 0.0
    %2095 = vmatpush1.msra.mxu0 0.0
    %2096 = vmatprep.subr.mxu0 0.0
    %2097 = vmatpush1.msra.mxu0 0.0
    %2098 = vmatprep.mubr.f32.mxu0 0.0
    %2099 = vmatmul.mubr.f32.gmra.mrb[0].mxu0 %v2032
    %v2100 = vpop.f32.mrb[0].mxu0
    %v2101 = vadd.f32 0.0, %v2100
    %v2102 = vpop.f32.mrb[0].mxu0
    %2103 = vdwg.mxu0
    %v2104 = vadd.f32 %v1863, %v2101
    %2105 = vrot.lane.b32.xlu0 %v233, 104
    %v2106 = vpop.permute.xlu0 %2105
    %2107 = vrot.lane.b32.xlu0 %v325, 104
    %v2108 = vpop.permute.xlu0 %2107
    %v2109 = vsel %vm435, %v2106, 0
    %v2111 = vsel %vm435, %v2108, 0
    %2113 = vmatprep.subr.mxu0 0.0
    %2114 = vmatpush1.xpose.msra.mxu0 %v2111
    %2115 = vmatprep.subr.mxu0 0.0
    %2116 = vmatpush1.xpose.msra.mxu0 0.0
    %2117 = vmatprep.subr.mxu0 0.0
    %2118 = vmatpush1.xpose.msra.mxu0 0.0
    %2119 = vmatprep.subr.mxu0 0.0
    %2120 = vmatpush1.xpose.msra.mxu0 0.0
    %2121 = vmatprep.subr.mxu0 0.0
    %2122 = vmatpush1.xpose.msra.mxu0 0.0
    %2123 = vmatprep.subr.mxu0 0.0
    %2124 = vmatpush1.xpose.msra.mxu0 0.0
    %2125 = vmatprep.subr.mxu0 0.0
    %2126 = vmatpush1.xpose.msra.mxu0 0.0
    %2127 = vmatprep.subr.mxu0 0.0
    %2128 = vmatpush1.xpose.msra.mxu0 0.0
    %2129 = vmatprep.subr.mxu0 0.0
    %2130 = vmatpush1.xpose.msra.mxu0 0.0
    %2131 = vmatprep.subr.mxu0 0.0
    %2132 = vmatpush1.xpose.msra.mxu0 0.0
    %2133 = vmatprep.subr.mxu0 0.0
    %2134 = vmatpush1.xpose.msra.mxu0 0.0
    %2135 = vmatprep.subr.mxu0 0.0
    %2136 = vmatpush1.xpose.msra.mxu0 0.0
    %2137 = vmatprep.subr.mxu0 0.0
    %2138 = vmatpush1.xpose.msra.mxu0 0.0
    %2139 = vmatprep.subr.mxu0 0.0
    %2140 = vmatpush1.xpose.msra.mxu0 0.0
    %2141 = vmatprep.subr.mxu0 0.0
    %2142 = vmatpush1.xpose.msra.mxu0 0.0
    %2143 = vmatprep.subr.mxu0 0.0
    %2144 = vmatpush1.xpose.msra.mxu0 0.0
    %2145 = vmatprep.subr.mxu0 0.0
    %2146 = vmatpush1.xpose.msra.mxu0 0.0
    %2147 = vmatprep.subr.mxu0 0.0
    %2148 = vmatpush1.xpose.msra.mxu0 0.0
    %2149 = vmatprep.subr.mxu0 0.0
    %2150 = vmatpush1.xpose.msra.mxu0 0.0
    %2151 = vmatprep.subr.mxu0 0.0
    %2152 = vmatpush1.xpose.msra.mxu0 0.0
    %2153 = vmatprep.subr.mxu0 0.0
    %2154 = vmatpush1.xpose.msra.mxu0 0.0
    %2155 = vmatprep.subr.mxu0 0.0
    %2156 = vmatpush1.xpose.msra.mxu0 0.0
    %2157 = vmatprep.subr.mxu0 0.0
    %2158 = vmatpush1.xpose.msra.mxu0 0.0
    %2159 = vmatprep.subr.mxu0 0.0
    %2160 = vmatpush1.xpose.msra.mxu0 0.0
    %2161 = vmatprep.subr.mxu0 0.0
    %2162 = vmatpush1.xpose.msra.mxu0 0.0
    %2163 = vmatprep.subr.mxu0 0.0
    %2164 = vmatpush1.xpose.msra.mxu0 0.0
    %2165 = vmatprep.subr.mxu0 0.0
    %2166 = vmatpush1.xpose.msra.mxu0 0.0
    %2167 = vmatprep.subr.mxu0 0.0
    %2168 = vmatpush1.xpose.msra.mxu0 0.0
    %2169 = vmatprep.subr.mxu0 0.0
    %2170 = vmatpush1.xpose.msra.mxu0 0.0
    %2171 = vmatprep.subr.mxu0 0.0
    %2172 = vmatpush1.xpose.msra.mxu0 0.0
    %2173 = vmatprep.subr.mxu0 0.0
    %2174 = vmatpush1.xpose.msra.mxu0 0.0
    %2175 = vmatprep.subr.mxu0 0.0
    %2176 = vmatpush1.xpose.msra.mxu0 0.0
    %2177 = vmatprep.mubr.f32.mxu0 0.0
    %2178 = vmatmul.mubr.f32.gmra.mrb[0].mxu0 %v2109
    %v2179 = vpop.f32.mrb[0].mxu0
    %v2180 = vadd.f32 %v429, %v2179
    %v2181 = vpop.f32.mrb[0].mxu0
    %2182 = vdwg.mxu0
    %v2183 = vsel %vm435, %v2180, -inf
    %2184 = vmax.xlane.f32.xlu0 %v2183
    %v2185 = vpop.xlane.xlu0 %2184
    %v2186 = vsub.f32 %v2180, %v2185
    %v2187 = vmul.f32 %v2186, 1.442695
    %v2188 = vpow.pop %v2187
    %v2189 = vsel %vm435, %v2188, 0.0
    %2190 = vadd.xlane.f32.xlu0 %v2189
    %v2191 = vpop.xlane.xlu0 %2190
    %v2192 = vrcp.pop %v2191
    %v2193 = vmul.f32 %v2188, %v2192
    %2194 = vrot.lane.b32.xlu0 %v419, 104
    %v2195 = vpop.permute.xlu0 %2194
    %v2198 = vsel %vm435, %v2193, 0
    %2200 = vmatprep.subr.mxu0 0.0
    %2201 = vmatpush1.msra.mxu0 %v2195
    %2202 = vmatprep.subr.mxu0 0.0
    %2203 = vmatpush1.msra.mxu0 0.0
    %2204 = vmatprep.subr.mxu0 0.0
    %2205 = vmatpush1.msra.mxu0 0.0
    %2206 = vmatprep.subr.mxu0 0.0
    %2207 = vmatpush1.msra.mxu0 0.0
    %2208 = vmatprep.subr.mxu0 0.0
    %2209 = vmatpush1.msra.mxu0 0.0
    %2210 = vmatprep.subr.mxu0 0.0
    %2211 = vmatpush1.msra.mxu0 0.0
    %2212 = vmatprep.subr.mxu0 0.0
    %2213 = vmatpush1.msra.mxu0 0.0
    %2214 = vmatprep.subr.mxu0 0.0
    %2215 = vmatpush1.msra.mxu0 0.0
    %2216 = vmatprep.subr.mxu0 0.0
    %2217 = vmatpush1.msra.mxu0 0.0
    %2218 = vmatprep.subr.mxu0 0.0
    %2219 = vmatpush1.msra.mxu0 0.0
    %2220 = vmatprep.subr.mxu0 0.0
    %2221 = vmatpush1.msra.mxu0 0.0
    %2222 = vmatprep.subr.mxu0 0.0
    %2223 = vmatpush1.msra.mxu0 0.0
    %2224 = vmatprep.subr.mxu0 0.0
    %2225 = vmatpush1.msra.mxu0 0.0
    %2226 = vmatprep.subr.mxu0 0.0
    %2227 = vmatpush1.msra.mxu0 0.0
    %2228 = vmatprep.subr.mxu0 0.0
    %2229 = vmatpush1.msra.mxu0 0.0
    %2230 = vmatprep.subr.mxu0 0.0
    %2231 = vmatpush1.msra.mxu0 0.0
    %2232 = vmatprep.subr.mxu0 0.0
    %2233 = vmatpush1.msra.mxu0 0.0
    %2234 = vmatprep.subr.mxu0 0.0
    %2235 = vmatpush1.msra.mxu0 0.0
    %2236 = vmatprep.subr.mxu0 0.0
    %2237 = vmatpush1.msra.mxu0 0.0
    %2238 = vmatprep.subr.mxu0 0.0
    %2239 = vmatpush1.msra.mxu0 0.0
    %2240 = vmatprep.subr.mxu0 0.0
    %2241 = vmatpush1.msra.mxu0 0.0
    %2242 = vmatprep.subr.mxu0 0.0
    %2243 = vmatpush1.msra.mxu0 0.0
    %2244 = vmatprep.subr.mxu0 0.0
    %2245 = vmatpush1.msra.mxu0 0.0
    %2246 = vmatprep.subr.mxu0 0.0
    %2247 = vmatpush1.msra.mxu0 0.0
    %2248 = vmatprep.subr.mxu0 0.0
    %2249 = vmatpush1.msra.mxu0 0.0
    %2250 = vmatprep.subr.mxu0 0.0
    %2251 = vmatpush1.msra.mxu0 0.0
    %2252 = vmatprep.subr.mxu0 0.0
    %2253 = vmatpush1.msra.mxu0 0.0
    %2254 = vmatprep.subr.mxu0 0.0
    %2255 = vmatpush1.msra.mxu0 0.0
    %2256 = vmatprep.subr.mxu0 0.0
    %2257 = vmatpush1.msra.mxu0 0.0
    %2258 = vmatprep.subr.mxu0 0.0
    %2259 = vmatpush1.msra.mxu0 0.0
    %2260 = vmatprep.subr.mxu0 0.0
    %2261 = vmatpush1.msra.mxu0 0.0
    %2262 = vmatprep.subr.mxu0 0.0
    %2263 = vmatpush1.msra.mxu0 0.0
    %2264 = vmatprep.mubr.f32.mxu0 0.0
    %2265 = vmatmul.mubr.f32.gmra.mrb[0].mxu0 %v2198
    %v2266 = vpop.f32.mrb[0].mxu0
    %v2267 = vadd.f32 0.0, %v2266
    %v2268 = vpop.f32.mrb[0].mxu0
    %2269 = vdwg.mxu0
    %v2271 = vsel %vm435, %v2267, 0
    %2273 = vmatprep.subr.mxu0 0.0
    %2274 = vmatpush1.msra.mxu0 %v433
    %2275 = vmatprep.subr.mxu0 0.0
    %2276 = vmatpush1.msra.mxu0 0.0
    %2277 = vmatprep.subr.mxu0 0.0
    %2278 = vmatpush1.msra.mxu0 0.0
    %2279 = vmatprep.subr.mxu0 0.0
    %2280 = vmatpush1.msra.mxu0 0.0
    %2281 = vmatprep.subr.mxu0 0.0
    %2282 = vmatpush1.msra.mxu0 0.0
    %2283 = vmatprep.subr.mxu0 0.0
    %2284 = vmatpush1.msra.mxu0 0.0
    %2285 = vmatprep.subr.mxu0 0.0
    %2286 = vmatpush1.msra.mxu0 0.0
    %2287 = vmatprep.subr.mxu0 0.0
    %2288 = vmatpush1.msra.mxu0 0.0
    %2289 = vmatprep.subr.mxu0 0.0
    %2290 = vmatpush1.msra.mxu0 0.0
    %2291 = vmatprep.subr.mxu0 0.0
    %2292 = vmatpush1.msra.mxu0 0.0
    %2293 = vmatprep.subr.mxu0 0.0
    %2294 = vmatpush1.msra.mxu0 0.0
    %2295 = vmatprep.subr.mxu0 0.0
    %2296 = vmatpush1.msra.mxu0 0.0
    %2297 = vmatprep.subr.mxu0 0.0
    %2298 = vmatpush1.msra.mxu0 0.0
    %2299 = vmatprep.subr.mxu0 0.0
    %2300 = vmatpush1.msra.mxu0 0.0
    %2301 = vmatprep.subr.mxu0 0.0
    %2302 = vmatpush1.msra.mxu0 0.0
    %2303 = vmatprep.subr.mxu0 0.0
    %2304 = vmatpush1.msra.mxu0 0.0
    %2305 = vmatprep.subr.mxu0 0.0
    %2306 = vmatpush1.msra.mxu0 0.0
    %2307 = vmatprep.subr.mxu0 0.0
    %2308 = vmatpush1.msra.mxu0 0.0
    %2309 = vmatprep.subr.mxu0 0.0
    %2310 = vmatpush1.msra.mxu0 0.0
    %2311 = vmatprep.subr.mxu0 0.0
    %2312 = vmatpush1.msra.mxu0 0.0
    %2313 = vmatprep.subr.mxu0 0.0
    %2314 = vmatpush1.msra.mxu0 0.0
    %2315 = vmatprep.subr.mxu0 0.0
    %2316 = vmatpush1.msra.mxu0 0.0
    %2317 = vmatprep.subr.mxu0 0.0
    %2318 = vmatpush1.msra.mxu0 0.0
    %2319 = vmatprep.subr.mxu0 0.0
    %2320 = vmatpush1.msra.mxu0 0.0
    %2321 = vmatprep.subr.mxu0 0.0
    %2322 = vmatpush1.msra.mxu0 0.0
    %2323 = vmatprep.subr.mxu0 0.0
    %2324 = vmatpush1.msra.mxu0 0.0
    %2325 = vmatprep.subr.mxu0 0.0
    %2326 = vmatpush1.msra.mxu0 0.0
    %2327 = vmatprep.subr.mxu0 0.0
    %2328 = vmatpush1.msra.mxu0 0.0
    %2329 = vmatprep.subr.mxu0 0.0
    %2330 = vmatpush1.msra.mxu0 0.0
    %2331 = vmatprep.subr.mxu0 0.0
    %2332 = vmatpush1.msra.mxu0 0.0
    %2333 = vmatprep.subr.mxu0 0.0
    %2334 = vmatpush1.msra.mxu0 0.0
    %2335 = vmatprep.subr.mxu0 0.0
    %2336 = vmatpush1.msra.mxu0 0.0
    %2337 = vmatprep.mubr.f32.mxu0 0.0
    %2338 = vmatmul.mubr.f32.gmra.mrb[0].mxu0 %v2271
    %v2339 = vpop.f32.mrb[0].mxu0
    %v2340 = vadd.f32 0.0, %v2339
    %v2341 = vpop.f32.mrb[0].mxu0
    %2342 = vdwg.mxu0
    %v2343 = vadd.f32 %v2104, %v2340
    %v2344 = vadd.f32 %v2343, %v1390
    %2345 = vst.msk [vmem:[#allocation14 + $0x8] sm:$0xff] %vm150, %v2344
    // Predicated region
    $region78: #{tpu_custom_call.1} parent=1 // pred_check
      _
    $region79: #{tpu_custom_call.1} parent=1 // pred_check_branch
      %2347 = sbr.rel (0) target = $region81
    $region80: #{tpu_custom_call.1} parent=1 // pred_region
      %s2349 = ssub.s32 256, 256
      %2350 = vsyncadd [#allocation4], %s2349
      %s2351 = sshll.u32 [#allocation14], 4
      %s2352 = int_to_ptr.vmem [resolvable:$true] %s2351
      %2357 = dma.vmem_to_hbm [thread:$0]  %s2352, 256, %s12, [#allocation4], 128, 128, 8
    $region81: #{tpu_custom_call.1} parent=1 // pred_fallthru
      _
    // Predicated region
    $region82: #{tpu_custom_call.1} parent=1 // pred_check
      _
    $region83: #{tpu_custom_call.1} parent=1 // pred_check_branch
      %2359 = sbr.rel (0) target = $region85
    $region84: #{tpu_custom_call.1} parent=1 // pred_region
      %2360 = dma.done [#allocation4], 256
    $region85: #{tpu_custom_call.1} parent=1 // pred_fallthru
      _
    %2361 = vsyncpa [#allocation3], 1
    %2362 = vsyncpa [#allocation6], 1
    %2363 = vsyncpa [#allocation9], 1
    %2364 = vsyncpa [#allocation12], 1
    %2365 = vsyncpa [#allocation4], 1

</llo_original>
